<compile_context>
chip_gen: v7x
topology: tpu7x:2x2x1
jax: 0.10.0
libtpu: 0.0.40
codegen_flags: <defaults>
</compile_context>

<pallas_src>
import functools
import math
import numpy as np
import jax
import jax.numpy as jnp
from jax import lax
from jax.experimental import pallas as pl
from jax.experimental.pallas import tpu as pltpu

SIGNAL_DIM = 6
CONTEXT_DIM = 10
HIDDEN_DIM = 128
ENC_OUT = 64
LSTM_H = 32

ACT_COLS = 16   # padded activation width (tactile 6 -> 16 cols, context 10 -> 16 cols)

# row offsets inside the packed 128-column bf16 weight slab
_W1_OFF, _W2_OFF, _W3_OFF = 0, 8, 136
_P1_OFF, _P2_OFF, _P3_OFF = 264, 520, 648
_WSLAB_ROWS = 776
# row offsets inside the packed 512-column (gate-tiled) bf16 LSTM slab
_WIH_OFF, _WHH_OFF = 0, 16
_LSLAB_ROWS = 48
# row indices inside the (8, 512) f32 bias slab
_B1, _B2, _B3, _PB1, _PB2, _PB3, _LB = 0, 1, 2, 3, 4, 5, 6


def _sigmoid(x):
    # Exactly one EUP tanh pass per sigmoid (avoid an exp + reciprocal lowering).
    return 0.5 * jnp.tanh(0.5 * x) + 0.5


def _touch_emotion_kernel(act_ref, w_ref, l_ref, b_ref, out_ref, *, n_tac, n_ctx, batch):
    """act_ref:(n_tac+n_ctx, 16) f32   w_ref:(776,128) bf16
    l_ref:(48,512) bf16   b_ref:(8,512) f32   out_ref:(B,128) f32."""
    f32, bf16 = jnp.float32, jnp.bfloat16
    B = batch
    S = n_tac // B        # tactile seq length (batch-major rows)
    S_ctx = n_ctx // B    # context seq length (time-major rows)

    # ---- TouchEncoder MLP over the flattened tactile sequence (dropout = identity)
    x = act_ref[0:n_tac, 0:8].astype(bf16)
    h = jnp.dot(x, w_ref[_W1_OFF:_W1_OFF + 8, :],
                preferred_element_type=f32) + b_ref[_B1:_B1 + 1, 0:128]
    h = jnp.maximum(h, 0.0)
    h = jnp.dot(h.astype(bf16), w_ref[_W2_OFF:_W2_OFF + 128, :],
                preferred_element_type=f32) + b_ref[_B2:_B2 + 1, 0:128]
    h = jnp.maximum(h, 0.0)
    emb = jnp.tanh(jnp.dot(h.astype(bf16), w_ref[_W3_OFF:_W3_OFF + 128, :],
                           preferred_element_type=f32) + b_ref[_B3:_B3 + 1, 0:128])
    # emb: (B*S, 128); cols 64..127 are exactly 0 (zero-padded w3/b3 cols).

    # ---- mean over the sequence axis: sublane (XLU) reductions, MXU stays free.
    # Slices are sublane-tile aligned for S=8; loop is static (B small).
    parts = [jnp.sum(emb[b * S:(b + 1) * S, :], axis=0, keepdims=True) for b in range(B)]
    emb_mean = jnp.concatenate(parts, axis=0) * (1.0 / S)            # (B, 128)

    # ---- single-layer LSTM over the context sequence (gate-tiled 512 layout)
    # Hoisted input projection: one matmul for every timestep, f32 bias added once.
    ctx = act_ref[n_tac:n_tac + n_ctx, :].astype(bf16)               # (S*B, 16) time-major
    gx = jnp.dot(ctx, l_ref[_WIH_OFF:_WIH_OFF + 16, :],
                 preferred_element_type=f32) + b_ref[_LB:_LB + 1, :]  # (S*B, 512)
    whh = l_ref[_WHH_OFF:_WHH_OFF + LSTM_H, :]                       # (32, 512), K=32 only

    h_t = jnp.zeros((B, 128), f32)
    c_t = jnp.zeros((B, 128), f32)
    for t in range(S_ctx):                     # static trip count -> fully unrolled
        # offset-0 lane slice of h_t (no rotate); K=32 contraction keeps MXU
        # staging on the serial chain minimal.
        gates = gx[t * B:(t + 1) * B, :] + jnp.dot(
            h_t[:, 0:LSTM_H].astype(bf16), whh, preferred_element_type=f32)
        # each gate sits in its own 128-lane tile (cols 0..31 real, rest 0);
        # padding lanes of i/f/o become 0.5 after sigmoid but only multiply
        # exact zeros (g_g padding = tanh(0) = 0, c_t initialised to 0).
        i_g = _sigmoid(gates[:, 0:128])
        f_g = _sigmoid(gates[:, 128:256])
        g_g = jnp.tanh(gates[:, 256:384])
        o_g = _sigmoid(gates[:, 384:512])
        c_t = f_g * c_t + i_g * g_g            # padding lanes stay exactly 0
        h_t = o_g * jnp.tanh(c_t)
    # h_t: (B, 128), cols 32..127 are exactly 0.

    # ---- arousal/valence predictor: fused concat matmul, lane-dense output
    comb = jnp.concatenate([emb_mean, h_t], axis=1).astype(bf16)     # (B, 256)
    z = jnp.dot(comb, w_ref[_P1_OFF:_P1_OFF + 256, :],
                preferred_element_type=f32) + b_ref[_PB1:_PB1 + 1, 0:128]
    z = jnp.maximum(z, 0.0)
    z = jnp.dot(z.astype(bf16), w_ref[_P2_OFF:_P2_OFF + 128, :],
                preferred_element_type=f32) + b_ref[_PB2:_PB2 + 1, 0:128]
    z = jnp.maximum(z, 0.0)
    z = jnp.dot(z.astype(bf16), w_ref[_P3_OFF:_P3_OFF + 128, :],
                preferred_element_type=f32) + b_ref[_PB3:_PB3 + 1, 0:128]
    out_ref[...] = jnp.tanh(z)                 # (B, 128); cols 0..1 are the result


def init_params(key):
    """Deterministic synthetic parameters with PyTorch-default-style uniform init."""
    ks = jax.random.split(key, 16)

    def lin(kw, kb, fan_in, fan_out):
        bound = 1.0 / math.sqrt(fan_in)
        w = jax.random.uniform(kw, (fan_in, fan_out), jnp.float32, -bound, bound)
        b = jax.random.uniform(kb, (1, fan_out), jnp.float32, -bound, bound)
        return w, b

    params = {}
    params["w1"], params["b1"] = lin(ks[0], ks[1], SIGNAL_DIM, HIDDEN_DIM)
    params["w2"], params["b2"] = lin(ks[2], ks[3], HIDDEN_DIM, HIDDEN_DIM)
    params["w3"], params["b3"] = lin(ks[4], ks[5], HIDDEN_DIM, ENC_OUT)
    lb = 1.0 / math.sqrt(LSTM_H)
    params["wih"] = jax.random.uniform(ks[6], (CONTEXT_DIM, 4 * LSTM_H), jnp.float32, -lb, lb)
    params["whh"] = jax.random.uniform(ks[7], (LSTM_H, 4 * LSTM_H), jnp.float32, -lb, lb)
    params["bih"] = jax.random.uniform(ks[8], (1, 4 * LSTM_H), jnp.float32, -lb, lb)
    params["bhh"] = jax.random.uniform(ks[9], (1, 4 * LSTM_H), jnp.float32, -lb, lb)
    p1w, params["pb1"] = lin(ks[10], ks[11], ENC_OUT + LSTM_H, HIDDEN_DIM)
    params["p1e"] = p1w[:ENC_OUT, :]
    params["p1c"] = p1w[ENC_OUT:, :]
    params["p2"], params["pb2"] = lin(ks[12], ks[13], HIDDEN_DIM, ENC_OUT)
    params["p3"], params["pb3"] = lin(ks[14], ks[15], ENC_OUT, 2)
    return params


def pack_params(p):
    """Pack parameters into 3 DMA slabs (bf16 weights, f32 biases), sublane-aligned."""
    f32, bf16 = jnp.float32, jnp.bfloat16
    z = lambda r, c: jnp.zeros((r, c), f32)

    # ---- 128-column weight slab (bf16) ------------------------------------
    w1 = jnp.concatenate([p["w1"], z(8 - SIGNAL_DIM, 128)], axis=0)            # (8,128)
    w2 = p["w2"]                                                               # (128,128)
    w3p = jnp.concatenate([p["w3"], z(128, 128 - ENC_OUT)], axis=1)            # (128,128)
    p1e_pad = jnp.concatenate([p["p1e"], z(128 - ENC_OUT, 128)], axis=0)       # (128,128)
    p1c_pad = jnp.concatenate([p["p1c"], z(128 - LSTM_H, 128)], axis=0)        # (128,128)
    p1cat = jnp.concatenate([p1e_pad, p1c_pad], axis=0)                        # (256,128)
    p2p = jnp.concatenate([p["p2"], z(128, 128 - ENC_OUT)], axis=1)            # (128,128)
    p3p = jnp.concatenate(
        [jnp.concatenate([p["p3"], z(ENC_OUT, 126)], axis=1), z(64, 128)], axis=0)  # (128,128)
    wslab_f32 = jnp.concatenate([w1, w2, w3p, p1cat, p2p, p3p], axis=0)        # (776,128)

    # ---- gate-tiled LSTM slab (each gate -> its own 128-lane tile) ---------
    def gate_tile(w):  # (rows, 4*32) -> (rows, 4*128)
        rows = w.shape[0]
        pieces = []
        for k in range(4):
            pieces.append(w[:, k * LSTM_H:(k + 1) * LSTM_H])
            pieces.append(z(rows, 128 - LSTM_H))
        return jnp.concatenate(pieces, axis=1)

    wih_t = jnp.concatenate([gate_tile(p["wih"]), z(16 - CONTEXT_DIM, 512)], axis=0)  # (16,512)
    whh_t = gate_tile(p["whh"])                                                       # (32,512), K unpadded
    lslab_f32 = jnp.concatenate([wih_t, whh_t], axis=0)                               # (48,512)

    # ---- f32 bias slab (8, 512) --------------------------------------------
    pad512 = lambda b: jnp.concatenate([b, z(1, 512 - b.shape[1])], axis=1)
    lstm_bias = gate_tile(p["bih"] + p["bhh"])                                        # (1,512)
    bslab = jnp.concatenate([
        pad512(p["b1"]), pad512(p["b2"]), pad512(p["b3"]), pad512(p["pb1"]),
        pad512(p["pb2"]), pad512(p["pb3"]), lstm_bias, z(1, 512)], axis=0)            # (8,512)

    # invariant checks: gate-tile padding lanes must be exactly zero (the
    # recurrence relies on it; c_t/h_t are zero-initialised in-kernel).
    for k in range(4):
        lo, hi = k * 128 + LSTM_H, (k + 1) * 128
        assert np.all(np.asarray(lslab_f32[:, lo:hi]) == 0.0)
        assert np.all(np.asarray(lstm_bias[:, lo:hi]) == 0.0)
    assert np.all(np.asarray(wslab_f32[_W3_OFF:_W3_OFF + 128, ENC_OUT:]) == 0.0)
    assert np.all(np.asarray(bslab[_B3, ENC_OUT:128]) == 0.0)

    return {"wslab": wslab_f32.astype(bf16),
            "lslab": lslab_f32.astype(bf16),
            "bslab": bslab}


@jax.jit
def touch_emotion_mapper(tactile_seq, context_seq, packed):
    """tactile_seq: (B, S, 6) f32; context_seq: (B, S_ctx, 10) f32 -> (B, 2) f32."""
    B, S, _ = tactile_seq.shape
    S_ctx = context_seq.shape[1]
    n_tac, n_ctx = B * S, S_ctx * B

    tac = tactile_seq.reshape(n_tac, SIGNAL_DIM).astype(jnp.float32)
    tac = jnp.pad(tac, ((0, 0), (0, ACT_COLS - SIGNAL_DIM)))                  # (B*S, 16)
    ctx = jnp.transpose(context_seq.astype(jnp.float32), (1, 0, 2))           # time-major
    ctx = ctx.reshape(n_ctx, CONTEXT_DIM)
    ctx = jnp.pad(ctx, ((0, 0), (0, ACT_COLS - CONTEXT_DIM)))                 # (S*B, 16)
    act = jnp.concatenate([tac, ctx], axis=0)                                 # one activation DMA

    kernel = functools.partial(_touch_emotion_kernel,
                               n_tac=n_tac, n_ctx=n_ctx, batch=B)
    vmem = pl.BlockSpec(memory_space=pltpu.MemorySpace.VMEM)
    out128 = pl.pallas_call(
        kernel,
        out_shape=jax.ShapeDtypeStruct((B, 128), jnp.float32),
        in_specs=[vmem] * 4,
        out_specs=vmem,
    )(act, packed["wslab"], packed["lslab"], packed["bslab"])
    return out128[:, :2]


def _reference(tactile_seq, context_seq, params):
    """Pure-JAX f32 reference for validation (mirrors the PyTorch module)."""
    B, S, _ = tactile_seq.shape
    x = tactile_seq.reshape(B * S, SIGNAL_DIM)
    h = jnp.maximum(x @ params["w1"] + params["b1"], 0.0)
    h = jnp.maximum(h @ params["w2"] + params["b2"], 0.0)
    emb = jnp.tanh(h @ params["w3"] + params["b3"]).reshape(B, S, ENC_OUT)
    emb_mean = emb.mean(axis=1)

    def step(carry, x_t):
        h_prev, c_prev = carry
        gates = x_t @ params["wih"] + h_prev @ params["whh"] + params["bih"] + params["bhh"]
        i_g = jax.nn.sigmoid(gates[:, :LSTM_H])
        f_g = jax.nn.sigmoid(gates[:, LSTM_H:2 * LSTM_H])
        g_g = jnp.tanh(gates[:, 2 * LSTM_H:3 * LSTM_H])
        o_g = jax.nn.sigmoid(gates[:, 3 * LSTM_H:])
        c_new = f_g * c_prev + i_g * g_g
        h_new = o_g * jnp.tanh(c_new)
        return (h_new, c_new), None

    h0 = jnp.zeros((B, LSTM_H), jnp.float32)
    c0 = jnp.zeros((B, LSTM_H), jnp.float32)
    (h_last, _), _ = lax.scan(step, (h0, c0), jnp.transpose(context_seq, (1, 0, 2)))

    z = emb_mean @ params["p1e"] + h_last @ params["p1c"] + params["pb1"]
    z = jnp.maximum(z, 0.0)
    z = jnp.maximum(z @ params["p2"] + params["pb2"], 0.0)
    z = z @ params["p3"] + params["pb3"]
    return jnp.tanh(z)


if __name__ == "__main__":
    B, S = 2, 8
    key = jax.random.PRNGKey(0)
    k_tac, k_ctx, k_par = jax.random.split(key, 3)

    tactile_seq = jax.random.normal(k_tac, (B, S, SIGNAL_DIM), jnp.float32)
    context_seq = jax.random.normal(k_ctx, (B, S, CONTEXT_DIM), jnp.float32)
    params = init_params(k_par)
    packed = pack_params(params)

    out = touch_emotion_mapper(tactile_seq, context_seq, packed)
    out = jax.block_until_ready(out)

    ref = jax.block_until_ready(_reference(tactile_seq, context_seq, params))
    assert out.shape == (B, 2)
    # bf16 weight slabs (per perf review); tolerance widened slightly vs the
    # full-f32 reference, though the default TPU f32 matmul contracts via bf16
    # anyway so the observed delta is tiny.
    np.testing.assert_allclose(np.asarray(out), np.asarray(ref), rtol=2e-3, atol=2e-3)

    print("KERNEL_OK")
</pallas_src>

<mosaic_0001>
module attributes {stable_mosaic.version = 11 : i64} {
  func.func @_touch_emotion_kernel(%arg0: memref<32x16xf32, #tpu.memory_space<vmem>>, %arg1: memref<776x128xbf16, #tpu.memory_space<vmem>>, %arg2: memref<48x512xbf16, #tpu.memory_space<vmem>>, %arg3: memref<8x512xf32, #tpu.memory_space<vmem>>, %arg4: memref<2x128xf32, #tpu.memory_space<vmem>>) attributes {dimension_semantics = [], scalar_prefetch = 0 : i64, scratch_operands = 0 : i64, tpu.core_type = #tpu.core_type<tc>} {
    %c0 = arith.constant 0 : index
    %c0_0 = arith.constant 0 : index
    %0 = vector.load %arg0[%c0, %c0_0] : memref<32x16xf32, #tpu.memory_space<vmem>>, vector<16x8xf32>
    %1 = arith.truncf %0 : vector<16x8xf32> to vector<16x8xbf16>
    %c0_1 = arith.constant 0 : index
    %c0_2 = arith.constant 0 : index
    %2 = vector.load %arg1[%c0_1, %c0_2] : memref<776x128xbf16, #tpu.memory_space<vmem>>, vector<8x128xbf16>
    %cst = arith.constant dense<0.000000e+00> : vector<16x128xf32>
    %3 = tpu.matmul %1, %2, %cst {dimension_numbers = #tpu.dot_dimension_numbers<[1], [0], [0], [1], [0, 0, 1, 1], [], []>} : vector<16x8xbf16>, vector<8x128xbf16>, vector<16x128xf32> -> vector<16x128xf32>
    %c0_3 = arith.constant 0 : index
    %c0_4 = arith.constant 0 : index
    %4 = vector.load %arg3[%c0_3, %c0_4] : memref<8x512xf32, #tpu.memory_space<vmem>>, vector<1x128xf32>
    %5 = vector.broadcast %4 : vector<1x128xf32> to vector<16x128xf32>
    %6 = arith.addf %3, %5 : vector<16x128xf32>
    %cst_5 = arith.constant 0.000000e+00 : f32
    %7 = vector.broadcast %cst_5 : f32 to vector<16x128xf32>
    %8 = arith.maximumf %6, %7 : vector<16x128xf32>
    %9 = arith.truncf %8 : vector<16x128xf32> to vector<16x128xbf16>
    %c8 = arith.constant 8 : index
    %c0_6 = arith.constant 0 : index
    %10 = vector.load %arg1[%c8, %c0_6] : memref<776x128xbf16, #tpu.memory_space<vmem>>, vector<128x128xbf16>
    %cst_7 = arith.constant dense<0.000000e+00> : vector<16x128xf32>
    %11 = tpu.matmul %9, %10, %cst_7 {dimension_numbers = #tpu.dot_dimension_numbers<[1], [0], [0], [1], [0, 0, 1, 1], [], []>} : vector<16x128xbf16>, vector<128x128xbf16>, vector<16x128xf32> -> vector<16x128xf32>
    %c1 = arith.constant 1 : index
    %c0_8 = arith.constant 0 : index
    %12 = vector.load %arg3[%c1, %c0_8] : memref<8x512xf32, #tpu.memory_space<vmem>>, vector<1x128xf32>
    %13 = vector.broadcast %12 : vector<1x128xf32> to vector<16x128xf32>
    %14 = arith.addf %11, %13 : vector<16x128xf32>
    %cst_9 = arith.constant 0.000000e+00 : f32
    %15 = vector.broadcast %cst_9 : f32 to vector<16x128xf32>
    %16 = arith.maximumf %14, %15 : vector<16x128xf32>
    %17 = arith.truncf %16 : vector<16x128xf32> to vector<16x128xbf16>
    %c136 = arith.constant 136 : index
    %c0_10 = arith.constant 0 : index
    %18 = vector.load %arg1[%c136, %c0_10] : memref<776x128xbf16, #tpu.memory_space<vmem>>, vector<128x128xbf16>
    %cst_11 = arith.constant dense<0.000000e+00> : vector<16x128xf32>
    %19 = tpu.matmul %17, %18, %cst_11 {dimension_numbers = #tpu.dot_dimension_numbers<[1], [0], [0], [1], [0, 0, 1, 1], [], []>} : vector<16x128xbf16>, vector<128x128xbf16>, vector<16x128xf32> -> vector<16x128xf32>
    %c2 = arith.constant 2 : index
    %c0_12 = arith.constant 0 : index
    %20 = vector.load %arg3[%c2, %c0_12] : memref<8x512xf32, #tpu.memory_space<vmem>>, vector<1x128xf32>
    %21 = vector.broadcast %20 : vector<1x128xf32> to vector<16x128xf32>
    %22 = arith.addf %19, %21 : vector<16x128xf32>
    %23 = math.tanh %22 : vector<16x128xf32>
    %24 = vector.extract_strided_slice %23 {offsets = [0, 0], sizes = [8, 128], strides = [1, 1]} : vector<16x128xf32> to vector<8x128xf32>
    %cst_13 = arith.constant dense<0.000000e+00> : vector<128xf32>
    %25 = vector.multi_reduction <add>, %24, %cst_13 [0] : vector<8x128xf32> to vector<128xf32>
    %26 = vector.shape_cast %25 : vector<128xf32> to vector<1x128xf32>
    %27 = vector.extract_strided_slice %23 {offsets = [8, 0], sizes = [8, 128], strides = [1, 1]} : vector<16x128xf32> to vector<8x128xf32>
    %cst_14 = arith.constant dense<0.000000e+00> : vector<128xf32>
    %28 = vector.multi_reduction <add>, %27, %cst_14 [0] : vector<8x128xf32> to vector<128xf32>
    %29 = vector.shape_cast %28 : vector<128xf32> to vector<1x128xf32>
    %30 = tpu.concatenate %26, %29 in 0 : vector<1x128xf32>, vector<1x128xf32> -> vector<2x128xf32>
    %cst_15 = arith.constant 1.250000e-01 : f32
    %31 = vector.broadcast %cst_15 : f32 to vector<2x128xf32>
    %32 = arith.mulf %30, %31 : vector<2x128xf32>
    %c16 = arith.constant 16 : index
    %c0_16 = arith.constant 0 : index
    %33 = vector.load %arg0[%c16, %c0_16] : memref<32x16xf32, #tpu.memory_space<vmem>>, vector<16x16xf32>
    %34 = arith.truncf %33 : vector<16x16xf32> to vector<16x16xbf16>
    %c0_17 = arith.constant 0 : index
    %c0_18 = arith.constant 0 : index
    %35 = vector.load %arg2[%c0_17, %c0_18] : memref<48x512xbf16, #tpu.memory_space<vmem>>, vector<16x512xbf16>
    %cst_19 = arith.constant dense<0.000000e+00> : vector<16x512xf32>
    %36 = tpu.matmul %34, %35, %cst_19 {dimension_numbers = #tpu.dot_dimension_numbers<[1], [0], [0], [1], [0, 0, 1, 1], [], []>} : vector<16x16xbf16>, vector<16x512xbf16>, vector<16x512xf32> -> vector<16x512xf32>
    %c6 = arith.constant 6 : index
    %c0_20 = arith.constant 0 : index
    %37 = vector.load %arg3[%c6, %c0_20] : memref<8x512xf32, #tpu.memory_space<vmem>>, vector<1x512xf32>
    %38 = vector.broadcast %37 : vector<1x512xf32> to vector<16x512xf32>
    %39 = arith.addf %36, %38 : vector<16x512xf32>
    %c16_21 = arith.constant 16 : index
    %c0_22 = arith.constant 0 : index
    %40 = vector.load %arg2[%c16_21, %c0_22] : memref<48x512xbf16, #tpu.memory_space<vmem>>, vector<32x512xbf16>
    %cst_23 = arith.constant 0.000000e+00 : f32
    %41 = vector.broadcast %cst_23 : f32 to vector<2x128xf32>
    %cst_24 = arith.constant 0.000000e+00 : f32
    %42 = vector.broadcast %cst_24 : f32 to vector<2x128xf32>
    %43 = vector.extract_strided_slice %39 {offsets = [0, 0], sizes = [2, 512], strides = [1, 1]} : vector<16x512xf32> to vector<2x512xf32>
    %44 = vector.extract_strided_slice %41 {offsets = [0, 0], sizes = [2, 32], strides = [1, 1]} : vector<2x128xf32> to vector<2x32xf32>
    %45 = arith.truncf %44 : vector<2x32xf32> to vector<2x32xbf16>
    %cst_25 = arith.constant dense<0.000000e+00> : vector<2x512xf32>
    %46 = tpu.matmul %45, %40, %cst_25 {dimension_numbers = #tpu.dot_dimension_numbers<[1], [0], [0], [1], [0, 0, 1, 1], [], []>} : vector<2x32xbf16>, vector<32x512xbf16>, vector<2x512xf32> -> vector<2x512xf32>
    %47 = arith.addf %43, %46 : vector<2x512xf32>
    %48 = vector.extract_strided_slice %47 {offsets = [0, 0], sizes = [2, 128], strides = [1, 1]} : vector<2x512xf32> to vector<2x128xf32>
    %cst_26 = arith.constant 5.000000e-01 : f32
    %49 = vector.broadcast %cst_26 : f32 to vector<2x128xf32>
    %50 = arith.mulf %49, %48 : vector<2x128xf32>
    %51 = math.tanh %50 : vector<2x128xf32>
    %cst_27 = arith.constant 5.000000e-01 : f32
    %52 = vector.broadcast %cst_27 : f32 to vector<2x128xf32>
    %53 = arith.mulf %52, %51 : vector<2x128xf32>
    %cst_28 = arith.constant 5.000000e-01 : f32
    %54 = vector.broadcast %cst_28 : f32 to vector<2x128xf32>
    %55 = arith.addf %53, %54 : vector<2x128xf32>
    %56 = vector.extract_strided_slice %47 {offsets = [0, 128], sizes = [2, 128], strides = [1, 1]} : vector<2x512xf32> to vector<2x128xf32>
    %cst_29 = arith.constant 5.000000e-01 : f32
    %57 = vector.broadcast %cst_29 : f32 to vector<2x128xf32>
    %58 = arith.mulf %57, %56 : vector<2x128xf32>
    %59 = math.tanh %58 : vector<2x128xf32>
    %cst_30 = arith.constant 5.000000e-01 : f32
    %60 = vector.broadcast %cst_30 : f32 to vector<2x128xf32>
    %61 = arith.mulf %60, %59 : vector<2x128xf32>
    %cst_31 = arith.constant 5.000000e-01 : f32
    %62 = vector.broadcast %cst_31 : f32 to vector<2x128xf32>
    %63 = arith.addf %61, %62 : vector<2x128xf32>
    %64 = vector.extract_strided_slice %47 {offsets = [0, 256], sizes = [2, 128], strides = [1, 1]} : vector<2x512xf32> to vector<2x128xf32>
    %65 = math.tanh %64 : vector<2x128xf32>
    %66 = vector.extract_strided_slice %47 {offsets = [0, 384], sizes = [2, 128], strides = [1, 1]} : vector<2x512xf32> to vector<2x128xf32>
    %cst_32 = arith.constant 5.000000e-01 : f32
    %67 = vector.broadcast %cst_32 : f32 to vector<2x128xf32>
    %68 = arith.mulf %67, %66 : vector<2x128xf32>
    %69 = math.tanh %68 : vector<2x128xf32>
    %cst_33 = arith.constant 5.000000e-01 : f32
    %70 = vector.broadcast %cst_33 : f32 to vector<2x128xf32>
    %71 = arith.mulf %70, %69 : vector<2x128xf32>
    %cst_34 = arith.constant 5.000000e-01 : f32
    %72 = vector.broadcast %cst_34 : f32 to vector<2x128xf32>
    %73 = arith.addf %71, %72 : vector<2x128xf32>
    %74 = arith.mulf %63, %42 : vector<2x128xf32>
    %75 = arith.mulf %55, %65 : vector<2x128xf32>
    %76 = arith.addf %74, %75 : vector<2x128xf32>
    %77 = math.tanh %76 : vector<2x128xf32>
    %78 = arith.mulf %73, %77 : vector<2x128xf32>
    %79 = vector.extract_strided_slice %39 {offsets = [2, 0], sizes = [2, 512], strides = [1, 1]} : vector<16x512xf32> to vector<2x512xf32>
    %80 = vector.extract_strided_slice %78 {offsets = [0, 0], sizes = [2, 32], strides = [1, 1]} : vector<2x128xf32> to vector<2x32xf32>
    %81 = arith.truncf %80 : vector<2x32xf32> to vector<2x32xbf16>
    %cst_35 = arith.constant dense<0.000000e+00> : vector<2x512xf32>
    %82 = tpu.matmul %81, %40, %cst_35 {dimension_numbers = #tpu.dot_dimension_numbers<[1], [0], [0], [1], [0, 0, 1, 1], [], []>} : vector<2x32xbf16>, vector<32x512xbf16>, vector<2x512xf32> -> vector<2x512xf32>
    %83 = arith.addf %79, %82 : vector<2x512xf32>
    %84 = vector.extract_strided_slice %83 {offsets = [0, 0], sizes = [2, 128], strides = [1, 1]} : vector<2x512xf32> to vector<2x128xf32>
    %cst_36 = arith.constant 5.000000e-01 : f32
    %85 = vector.broadcast %cst_36 : f32 to vector<2x128xf32>
    %86 = arith.mulf %85, %84 : vector<2x128xf32>
    %87 = math.tanh %86 : vector<2x128xf32>
    %cst_37 = arith.constant 5.000000e-01 : f32
    %88 = vector.broadcast %cst_37 : f32 to vector<2x128xf32>
    %89 = arith.mulf %88, %87 : vector<2x128xf32>
    %cst_38 = arith.constant 5.000000e-01 : f32
    %90 = vector.broadcast %cst_38 : f32 to vector<2x128xf32>
    %91 = arith.addf %89, %90 : vector<2x128xf32>
    %92 = vector.extract_strided_slice %83 {offsets = [0, 128], sizes = [2, 128], strides = [1, 1]} : vector<2x512xf32> to vector<2x128xf32>
    %cst_39 = arith.constant 5.000000e-01 : f32
    %93 = vector.broadcast %cst_39 : f32 to vector<2x128xf32>
    %94 = arith.mulf %93, %92 : vector<2x128xf32>
    %95 = math.tanh %94 : vector<2x128xf32>
    %cst_40 = arith.constant 5.000000e-01 : f32
    %96 = vector.broadcast %cst_40 : f32 to vector<2x128xf32>
    %97 = arith.mulf %96, %95 : vector<2x128xf32>
    %cst_41 = arith.constant 5.000000e-01 : f32
    %98 = vector.broadcast %cst_41 : f32 to vector<2x128xf32>
    %99 = arith.addf %97, %98 : vector<2x128xf32>
    %100 = vector.extract_strided_slice %83 {offsets = [0, 256], sizes = [2, 128], strides = [1, 1]} : vector<2x512xf32> to vector<2x128xf32>
    %101 = math.tanh %100 : vector<2x128xf32>
    %102 = vector.extract_strided_slice %83 {offsets = [0, 384], sizes = [2, 128], strides = [1, 1]} : vector<2x512xf32> to vector<2x128xf32>
    %cst_42 = arith.constant 5.000000e-01 : f32
    %103 = vector.broadcast %cst_42 : f32 to vector<2x128xf32>
    %104 = arith.mulf %103, %102 : vector<2x128xf32>
    %105 = math.tanh %104 : vector<2x128xf32>
    %cst_43 = arith.constant 5.000000e-01 : f32
    %106 = vector.broadcast %cst_43 : f32 to vector<2x128xf32>
    %107 = arith.mulf %106, %105 : vector<2x128xf32>
    %cst_44 = arith.constant 5.000000e-01 : f32
    %108 = vector.broadcast %cst_44 : f32 to vector<2x128xf32>
    %109 = arith.addf %107, %108 : vector<2x128xf32>
    %110 = arith.mulf %99, %76 : vector<2x128xf32>
    %111 = arith.mulf %91, %101 : vector<2x128xf32>
    %112 = arith.addf %110, %111 : vector<2x128xf32>
    %113 = math.tanh %112 : vector<2x128xf32>
    %114 = arith.mulf %109, %113 : vector<2x128xf32>
    %115 = vector.extract_strided_slice %39 {offsets = [4, 0], sizes = [2, 512], strides = [1, 1]} : vector<16x512xf32> to vector<2x512xf32>
    %116 = vector.extract_strided_slice %114 {offsets = [0, 0], sizes = [2, 32], strides = [1, 1]} : vector<2x128xf32> to vector<2x32xf32>
    %117 = arith.truncf %116 : vector<2x32xf32> to vector<2x32xbf16>
    %cst_45 = arith.constant dense<0.000000e+00> : vector<2x512xf32>
    %118 = tpu.matmul %117, %40, %cst_45 {dimension_numbers = #tpu.dot_dimension_numbers<[1], [0], [0], [1], [0, 0, 1, 1], [], []>} : vector<2x32xbf16>, vector<32x512xbf16>, vector<2x512xf32> -> vector<2x512xf32>
    %119 = arith.addf %115, %118 : vector<2x512xf32>
    %120 = vector.extract_strided_slice %119 {offsets = [0, 0], sizes = [2, 128], strides = [1, 1]} : vector<2x512xf32> to vector<2x128xf32>
    %cst_46 = arith.constant 5.000000e-01 : f32
    %121 = vector.broadcast %cst_46 : f32 to vector<2x128xf32>
    %122 = arith.mulf %121, %120 : vector<2x128xf32>
    %123 = math.tanh %122 : vector<2x128xf32>
    %cst_47 = arith.constant 5.000000e-01 : f32
    %124 = vector.broadcast %cst_47 : f32 to vector<2x128xf32>
    %125 = arith.mulf %124, %123 : vector<2x128xf32>
    %cst_48 = arith.constant 5.000000e-01 : f32
    %126 = vector.broadcast %cst_48 : f32 to vector<2x128xf32>
    %127 = arith.addf %125, %126 : vector<2x128xf32>
    %128 = vector.extract_strided_slice %119 {offsets = [0, 128], sizes = [2, 128], strides = [1, 1]} : vector<2x512xf32> to vector<2x128xf32>
    %cst_49 = arith.constant 5.000000e-01 : f32
    %129 = vector.broadcast %cst_49 : f32 to vector<2x128xf32>
    %130 = arith.mulf %129, %128 : vector<2x128xf32>
    %131 = math.tanh %130 : vector<2x128xf32>
    %cst_50 = arith.constant 5.000000e-01 : f32
    %132 = vector.broadcast %cst_50 : f32 to vector<2x128xf32>
    %133 = arith.mulf %132, %131 : vector<2x128xf32>
    %cst_51 = arith.constant 5.000000e-01 : f32
    %134 = vector.broadcast %cst_51 : f32 to vector<2x128xf32>
    %135 = arith.addf %133, %134 : vector<2x128xf32>
    %136 = vector.extract_strided_slice %119 {offsets = [0, 256], sizes = [2, 128], strides = [1, 1]} : vector<2x512xf32> to vector<2x128xf32>
    %137 = math.tanh %136 : vector<2x128xf32>
    %138 = vector.extract_strided_slice %119 {offsets = [0, 384], sizes = [2, 128], strides = [1, 1]} : vector<2x512xf32> to vector<2x128xf32>
    %cst_52 = arith.constant 5.000000e-01 : f32
    %139 = vector.broadcast %cst_52 : f32 to vector<2x128xf32>
    %140 = arith.mulf %139, %138 : vector<2x128xf32>
    %141 = math.tanh %140 : vector<2x128xf32>
    %cst_53 = arith.constant 5.000000e-01 : f32
    %142 = vector.broadcast %cst_53 : f32 to vector<2x128xf32>
    %143 = arith.mulf %142, %141 : vector<2x128xf32>
    %cst_54 = arith.constant 5.000000e-01 : f32
    %144 = vector.broadcast %cst_54 : f32 to vector<2x128xf32>
    %145 = arith.addf %143, %144 : vector<2x128xf32>
    %146 = arith.mulf %135, %112 : vector<2x128xf32>
    %147 = arith.mulf %127, %137 : vector<2x128xf32>
    %148 = arith.addf %146, %147 : vector<2x128xf32>
    %149 = math.tanh %148 : vector<2x128xf32>
    %150 = arith.mulf %145, %149 : vector<2x128xf32>
    %151 = vector.extract_strided_slice %39 {offsets = [6, 0], sizes = [2, 512], strides = [1, 1]} : vector<16x512xf32> to vector<2x512xf32>
    %152 = vector.extract_strided_slice %150 {offsets = [0, 0], sizes = [2, 32], strides = [1, 1]} : vector<2x128xf32> to vector<2x32xf32>
    %153 = arith.truncf %152 : vector<2x32xf32> to vector<2x32xbf16>
    %cst_55 = arith.constant dense<0.000000e+00> : vector<2x512xf32>
    %154 = tpu.matmul %153, %40, %cst_55 {dimension_numbers = #tpu.dot_dimension_numbers<[1], [0], [0], [1], [0, 0, 1, 1], [], []>} : vector<2x32xbf16>, vector<32x512xbf16>, vector<2x512xf32> -> vector<2x512xf32>
    %155 = arith.addf %151, %154 : vector<2x512xf32>
    %156 = vector.extract_strided_slice %155 {offsets = [0, 0], sizes = [2, 128], strides = [1, 1]} : vector<2x512xf32> to vector<2x128xf32>
    %cst_56 = arith.constant 5.000000e-01 : f32
    %157 = vector.broadcast %cst_56 : f32 to vector<2x128xf32>
    %158 = arith.mulf %157, %156 : vector<2x128xf32>
    %159 = math.tanh %158 : vector<2x128xf32>
    %cst_57 = arith.constant 5.000000e-01 : f32
    %160 = vector.broadcast %cst_57 : f32 to vector<2x128xf32>
    %161 = arith.mulf %160, %159 : vector<2x128xf32>
    %cst_58 = arith.constant 5.000000e-01 : f32
    %162 = vector.broadcast %cst_58 : f32 to vector<2x128xf32>
    %163 = arith.addf %161, %162 : vector<2x128xf32>
    %164 = vector.extract_strided_slice %155 {offsets = [0, 128], sizes = [2, 128], strides = [1, 1]} : vector<2x512xf32> to vector<2x128xf32>
    %cst_59 = arith.constant 5.000000e-01 : f32
    %165 = vector.broadcast %cst_59 : f32 to vector<2x128xf32>
    %166 = arith.mulf %165, %164 : vector<2x128xf32>
    %167 = math.tanh %166 : vector<2x128xf32>
    %cst_60 = arith.constant 5.000000e-01 : f32
    %168 = vector.broadcast %cst_60 : f32 to vector<2x128xf32>
    %169 = arith.mulf %168, %167 : vector<2x128xf32>
    %cst_61 = arith.constant 5.000000e-01 : f32
    %170 = vector.broadcast %cst_61 : f32 to vector<2x128xf32>
    %171 = arith.addf %169, %170 : vector<2x128xf32>
    %172 = vector.extract_strided_slice %155 {offsets = [0, 256], sizes = [2, 128], strides = [1, 1]} : vector<2x512xf32> to vector<2x128xf32>
    %173 = math.tanh %172 : vector<2x128xf32>
    %174 = vector.extract_strided_slice %155 {offsets = [0, 384], sizes = [2, 128], strides = [1, 1]} : vector<2x512xf32> to vector<2x128xf32>
    %cst_62 = arith.constant 5.000000e-01 : f32
    %175 = vector.broadcast %cst_62 : f32 to vector<2x128xf32>
    %176 = arith.mulf %175, %174 : vector<2x128xf32>
    %177 = math.tanh %176 : vector<2x128xf32>
    %cst_63 = arith.constant 5.000000e-01 : f32
    %178 = vector.broadcast %cst_63 : f32 to vector<2x128xf32>
    %179 = arith.mulf %178, %177 : vector<2x128xf32>
    %cst_64 = arith.constant 5.000000e-01 : f32
    %180 = vector.broadcast %cst_64 : f32 to vector<2x128xf32>
    %181 = arith.addf %179, %180 : vector<2x128xf32>
    %182 = arith.mulf %171, %148 : vector<2x128xf32>
    %183 = arith.mulf %163, %173 : vector<2x128xf32>
    %184 = arith.addf %182, %183 : vector<2x128xf32>
    %185 = math.tanh %184 : vector<2x128xf32>
    %186 = arith.mulf %181, %185 : vector<2x128xf32>
    %187 = vector.extract_strided_slice %39 {offsets = [8, 0], sizes = [2, 512], strides = [1, 1]} : vector<16x512xf32> to vector<2x512xf32>
    %188 = vector.extract_strided_slice %186 {offsets = [0, 0], sizes = [2, 32], strides = [1, 1]} : vector<2x128xf32> to vector<2x32xf32>
    %189 = arith.truncf %188 : vector<2x32xf32> to vector<2x32xbf16>
    %cst_65 = arith.constant dense<0.000000e+00> : vector<2x512xf32>
    %190 = tpu.matmul %189, %40, %cst_65 {dimension_numbers = #tpu.dot_dimension_numbers<[1], [0], [0], [1], [0, 0, 1, 1], [], []>} : vector<2x32xbf16>, vector<32x512xbf16>, vector<2x512xf32> -> vector<2x512xf32>
    %191 = arith.addf %187, %190 : vector<2x512xf32>
    %192 = vector.extract_strided_slice %191 {offsets = [0, 0], sizes = [2, 128], strides = [1, 1]} : vector<2x512xf32> to vector<2x128xf32>
    %cst_66 = arith.constant 5.000000e-01 : f32
    %193 = vector.broadcast %cst_66 : f32 to vector<2x128xf32>
    %194 = arith.mulf %193, %192 : vector<2x128xf32>
    %195 = math.tanh %194 : vector<2x128xf32>
    %cst_67 = arith.constant 5.000000e-01 : f32
    %196 = vector.broadcast %cst_67 : f32 to vector<2x128xf32>
    %197 = arith.mulf %196, %195 : vector<2x128xf32>
    %cst_68 = arith.constant 5.000000e-01 : f32
    %198 = vector.broadcast %cst_68 : f32 to vector<2x128xf32>
    %199 = arith.addf %197, %198 : vector<2x128xf32>
    %200 = vector.extract_strided_slice %191 {offsets = [0, 128], sizes = [2, 128], strides = [1, 1]} : vector<2x512xf32> to vector<2x128xf32>
    %cst_69 = arith.constant 5.000000e-01 : f32
    %201 = vector.broadcast %cst_69 : f32 to vector<2x128xf32>
    %202 = arith.mulf %201, %200 : vector<2x128xf32>
    %203 = math.tanh %202 : vector<2x128xf32>
    %cst_70 = arith.constant 5.000000e-01 : f32
    %204 = vector.broadcast %cst_70 : f32 to vector<2x128xf32>
    %205 = arith.mulf %204, %203 : vector<2x128xf32>
    %cst_71 = arith.constant 5.000000e-01 : f32
    %206 = vector.broadcast %cst_71 : f32 to vector<2x128xf32>
    %207 = arith.addf %205, %206 : vector<2x128xf32>
    %208 = vector.extract_strided_slice %191 {offsets = [0, 256], sizes = [2, 128], strides = [1, 1]} : vector<2x512xf32> to vector<2x128xf32>
    %209 = math.tanh %208 : vector<2x128xf32>
    %210 = vector.extract_strided_slice %191 {offsets = [0, 384], sizes = [2, 128], strides = [1, 1]} : vector<2x512xf32> to vector<2x128xf32>
    %cst_72 = arith.constant 5.000000e-01 : f32
    %211 = vector.broadcast %cst_72 : f32 to vector<2x128xf32>
    %212 = arith.mulf %211, %210 : vector<2x128xf32>
    %213 = math.tanh %212 : vector<2x128xf32>
    %cst_73 = arith.constant 5.000000e-01 : f32
    %214 = vector.broadcast %cst_73 : f32 to vector<2x128xf32>
    %215 = arith.mulf %214, %213 : vector<2x128xf32>
    %cst_74 = arith.constant 5.000000e-01 : f32
    %216 = vector.broadcast %cst_74 : f32 to vector<2x128xf32>
    %217 = arith.addf %215, %216 : vector<2x128xf32>
    %218 = arith.mulf %207, %184 : vector<2x128xf32>
    %219 = arith.mulf %199, %209 : vector<2x128xf32>
    %220 = arith.addf %218, %219 : vector<2x128xf32>
    %221 = math.tanh %220 : vector<2x128xf32>
    %222 = arith.mulf %217, %221 : vector<2x128xf32>
    %223 = vector.extract_strided_slice %39 {offsets = [10, 0], sizes = [2, 512], strides = [1, 1]} : vector<16x512xf32> to vector<2x512xf32>
    %224 = vector.extract_strided_slice %222 {offsets = [0, 0], sizes = [2, 32], strides = [1, 1]} : vector<2x128xf32> to vector<2x32xf32>
    %225 = arith.truncf %224 : vector<2x32xf32> to vector<2x32xbf16>
    %cst_75 = arith.constant dense<0.000000e+00> : vector<2x512xf32>
    %226 = tpu.matmul %225, %40, %cst_75 {dimension_numbers = #tpu.dot_dimension_numbers<[1], [0], [0], [1], [0, 0, 1, 1], [], []>} : vector<2x32xbf16>, vector<32x512xbf16>, vector<2x512xf32> -> vector<2x512xf32>
    %227 = arith.addf %223, %226 : vector<2x512xf32>
    %228 = vector.extract_strided_slice %227 {offsets = [0, 0], sizes = [2, 128], strides = [1, 1]} : vector<2x512xf32> to vector<2x128xf32>
    %cst_76 = arith.constant 5.000000e-01 : f32
    %229 = vector.broadcast %cst_76 : f32 to vector<2x128xf32>
    %230 = arith.mulf %229, %228 : vector<2x128xf32>
    %231 = math.tanh %230 : vector<2x128xf32>
    %cst_77 = arith.constant 5.000000e-01 : f32
    %232 = vector.broadcast %cst_77 : f32 to vector<2x128xf32>
    %233 = arith.mulf %232, %231 : vector<2x128xf32>
    %cst_78 = arith.constant 5.000000e-01 : f32
    %234 = vector.broadcast %cst_78 : f32 to vector<2x128xf32>
    %235 = arith.addf %233, %234 : vector<2x128xf32>
    %236 = vector.extract_strided_slice %227 {offsets = [0, 128], sizes = [2, 128], strides = [1, 1]} : vector<2x512xf32> to vector<2x128xf32>
    %cst_79 = arith.constant 5.000000e-01 : f32
    %237 = vector.broadcast %cst_79 : f32 to vector<2x128xf32>
    %238 = arith.mulf %237, %236 : vector<2x128xf32>
    %239 = math.tanh %238 : vector<2x128xf32>
    %cst_80 = arith.constant 5.000000e-01 : f32
    %240 = vector.broadcast %cst_80 : f32 to vector<2x128xf32>
    %241 = arith.mulf %240, %239 : vector<2x128xf32>
    %cst_81 = arith.constant 5.000000e-01 : f32
    %242 = vector.broadcast %cst_81 : f32 to vector<2x128xf32>
    %243 = arith.addf %241, %242 : vector<2x128xf32>
    %244 = vector.extract_strided_slice %227 {offsets = [0, 256], sizes = [2, 128], strides = [1, 1]} : vector<2x512xf32> to vector<2x128xf32>
    %245 = math.tanh %244 : vector<2x128xf32>
    %246 = vector.extract_strided_slice %227 {offsets = [0, 384], sizes = [2, 128], strides = [1, 1]} : vector<2x512xf32> to vector<2x128xf32>
    %cst_82 = arith.constant 5.000000e-01 : f32
    %247 = vector.broadcast %cst_82 : f32 to vector<2x128xf32>
    %248 = arith.mulf %247, %246 : vector<2x128xf32>
    %249 = math.tanh %248 : vector<2x128xf32>
    %cst_83 = arith.constant 5.000000e-01 : f32
    %250 = vector.broadcast %cst_83 : f32 to vector<2x128xf32>
    %251 = arith.mulf %250, %249 : vector<2x128xf32>
    %cst_84 = arith.constant 5.000000e-01 : f32
    %252 = vector.broadcast %cst_84 : f32 to vector<2x128xf32>
    %253 = arith.addf %251, %252 : vector<2x128xf32>
    %254 = arith.mulf %243, %220 : vector<2x128xf32>
    %255 = arith.mulf %235, %245 : vector<2x128xf32>
    %256 = arith.addf %254, %255 : vector<2x128xf32>
    %257 = math.tanh %256 : vector<2x128xf32>
    %258 = arith.mulf %253, %257 : vector<2x128xf32>
    %259 = vector.extract_strided_slice %39 {offsets = [12, 0], sizes = [2, 512], strides = [1, 1]} : vector<16x512xf32> to vector<2x512xf32>
    %260 = vector.extract_strided_slice %258 {offsets = [0, 0], sizes = [2, 32], strides = [1, 1]} : vector<2x128xf32> to vector<2x32xf32>
    %261 = arith.truncf %260 : vector<2x32xf32> to vector<2x32xbf16>
    %cst_85 = arith.constant dense<0.000000e+00> : vector<2x512xf32>
    %262 = tpu.matmul %261, %40, %cst_85 {dimension_numbers = #tpu.dot_dimension_numbers<[1], [0], [0], [1], [0, 0, 1, 1], [], []>} : vector<2x32xbf16>, vector<32x512xbf16>, vector<2x512xf32> -> vector<2x512xf32>
    %263 = arith.addf %259, %262 : vector<2x512xf32>
    %264 = vector.extract_strided_slice %263 {offsets = [0, 0], sizes = [2, 128], strides = [1, 1]} : vector<2x512xf32> to vector<2x128xf32>
    %cst_86 = arith.constant 5.000000e-01 : f32
    %265 = vector.broadcast %cst_86 : f32 to vector<2x128xf32>
    %266 = arith.mulf %265, %264 : vector<2x128xf32>
    %267 = math.tanh %266 : vector<2x128xf32>
    %cst_87 = arith.constant 5.000000e-01 : f32
    %268 = vector.broadcast %cst_87 : f32 to vector<2x128xf32>
    %269 = arith.mulf %268, %267 : vector<2x128xf32>
    %cst_88 = arith.constant 5.000000e-01 : f32
    %270 = vector.broadcast %cst_88 : f32 to vector<2x128xf32>
    %271 = arith.addf %269, %270 : vector<2x128xf32>
    %272 = vector.extract_strided_slice %263 {offsets = [0, 128], sizes = [2, 128], strides = [1, 1]} : vector<2x512xf32> to vector<2x128xf32>
    %cst_89 = arith.constant 5.000000e-01 : f32
    %273 = vector.broadcast %cst_89 : f32 to vector<2x128xf32>
    %274 = arith.mulf %273, %272 : vector<2x128xf32>
    %275 = math.tanh %274 : vector<2x128xf32>
    %cst_90 = arith.constant 5.000000e-01 : f32
    %276 = vector.broadcast %cst_90 : f32 to vector<2x128xf32>
    %277 = arith.mulf %276, %275 : vector<2x128xf32>
    %cst_91 = arith.constant 5.000000e-01 : f32
    %278 = vector.broadcast %cst_91 : f32 to vector<2x128xf32>
    %279 = arith.addf %277, %278 : vector<2x128xf32>
    %280 = vector.extract_strided_slice %263 {offsets = [0, 256], sizes = [2, 128], strides = [1, 1]} : vector<2x512xf32> to vector<2x128xf32>
    %281 = math.tanh %280 : vector<2x128xf32>
    %282 = vector.extract_strided_slice %263 {offsets = [0, 384], sizes = [2, 128], strides = [1, 1]} : vector<2x512xf32> to vector<2x128xf32>
    %cst_92 = arith.constant 5.000000e-01 : f32
    %283 = vector.broadcast %cst_92 : f32 to vector<2x128xf32>
    %284 = arith.mulf %283, %282 : vector<2x128xf32>
    %285 = math.tanh %284 : vector<2x128xf32>
    %cst_93 = arith.constant 5.000000e-01 : f32
    %286 = vector.broadcast %cst_93 : f32 to vector<2x128xf32>
    %287 = arith.mulf %286, %285 : vector<2x128xf32>
    %cst_94 = arith.constant 5.000000e-01 : f32
    %288 = vector.broadcast %cst_94 : f32 to vector<2x128xf32>
    %289 = arith.addf %287, %288 : vector<2x128xf32>
    %290 = arith.mulf %279, %256 : vector<2x128xf32>
    %291 = arith.mulf %271, %281 : vector<2x128xf32>
    %292 = arith.addf %290, %291 : vector<2x128xf32>
    %293 = math.tanh %292 : vector<2x128xf32>
    %294 = arith.mulf %289, %293 : vector<2x128xf32>
    %295 = vector.extract_strided_slice %39 {offsets = [14, 0], sizes = [2, 512], strides = [1, 1]} : vector<16x512xf32> to vector<2x512xf32>
    %296 = vector.extract_strided_slice %294 {offsets = [0, 0], sizes = [2, 32], strides = [1, 1]} : vector<2x128xf32> to vector<2x32xf32>
    %297 = arith.truncf %296 : vector<2x32xf32> to vector<2x32xbf16>
    %cst_95 = arith.constant dense<0.000000e+00> : vector<2x512xf32>
    %298 = tpu.matmul %297, %40, %cst_95 {dimension_numbers = #tpu.dot_dimension_numbers<[1], [0], [0], [1], [0, 0, 1, 1], [], []>} : vector<2x32xbf16>, vector<32x512xbf16>, vector<2x512xf32> -> vector<2x512xf32>
    %299 = arith.addf %295, %298 : vector<2x512xf32>
    %300 = vector.extract_strided_slice %299 {offsets = [0, 0], sizes = [2, 128], strides = [1, 1]} : vector<2x512xf32> to vector<2x128xf32>
    %cst_96 = arith.constant 5.000000e-01 : f32
    %301 = vector.broadcast %cst_96 : f32 to vector<2x128xf32>
    %302 = arith.mulf %301, %300 : vector<2x128xf32>
    %303 = math.tanh %302 : vector<2x128xf32>
    %cst_97 = arith.constant 5.000000e-01 : f32
    %304 = vector.broadcast %cst_97 : f32 to vector<2x128xf32>
    %305 = arith.mulf %304, %303 : vector<2x128xf32>
    %cst_98 = arith.constant 5.000000e-01 : f32
    %306 = vector.broadcast %cst_98 : f32 to vector<2x128xf32>
    %307 = arith.addf %305, %306 : vector<2x128xf32>
    %308 = vector.extract_strided_slice %299 {offsets = [0, 128], sizes = [2, 128], strides = [1, 1]} : vector<2x512xf32> to vector<2x128xf32>
    %cst_99 = arith.constant 5.000000e-01 : f32
    %309 = vector.broadcast %cst_99 : f32 to vector<2x128xf32>
    %310 = arith.mulf %309, %308 : vector<2x128xf32>
    %311 = math.tanh %310 : vector<2x128xf32>
    %cst_100 = arith.constant 5.000000e-01 : f32
    %312 = vector.broadcast %cst_100 : f32 to vector<2x128xf32>
    %313 = arith.mulf %312, %311 : vector<2x128xf32>
    %cst_101 = arith.constant 5.000000e-01 : f32
    %314 = vector.broadcast %cst_101 : f32 to vector<2x128xf32>
    %315 = arith.addf %313, %314 : vector<2x128xf32>
    %316 = vector.extract_strided_slice %299 {offsets = [0, 256], sizes = [2, 128], strides = [1, 1]} : vector<2x512xf32> to vector<2x128xf32>
    %317 = math.tanh %316 : vector<2x128xf32>
    %318 = vector.extract_strided_slice %299 {offsets = [0, 384], sizes = [2, 128], strides = [1, 1]} : vector<2x512xf32> to vector<2x128xf32>
    %cst_102 = arith.constant 5.000000e-01 : f32
    %319 = vector.broadcast %cst_102 : f32 to vector<2x128xf32>
    %320 = arith.mulf %319, %318 : vector<2x128xf32>
    %321 = math.tanh %320 : vector<2x128xf32>
    %cst_103 = arith.constant 5.000000e-01 : f32
    %322 = vector.broadcast %cst_103 : f32 to vector<2x128xf32>
    %323 = arith.mulf %322, %321 : vector<2x128xf32>
    %cst_104 = arith.constant 5.000000e-01 : f32
    %324 = vector.broadcast %cst_104 : f32 to vector<2x128xf32>
    %325 = arith.addf %323, %324 : vector<2x128xf32>
    %326 = arith.mulf %315, %292 : vector<2x128xf32>
    %327 = arith.mulf %307, %317 : vector<2x128xf32>
    %328 = arith.addf %326, %327 : vector<2x128xf32>
    %329 = math.tanh %328 : vector<2x128xf32>
    %330 = arith.mulf %325, %329 : vector<2x128xf32>
    %331 = tpu.concatenate %32, %330 in 1 : vector<2x128xf32>, vector<2x128xf32> -> vector<2x256xf32>
    %332 = arith.truncf %331 : vector<2x256xf32> to vector<2x256xbf16>
    %c264 = arith.constant 264 : index
    %c0_105 = arith.constant 0 : index
    %333 = vector.load %arg1[%c264, %c0_105] : memref<776x128xbf16, #tpu.memory_space<vmem>>, vector<256x128xbf16>
    %cst_106 = arith.constant dense<0.000000e+00> : vector<2x128xf32>
    %334 = tpu.matmul %332, %333, %cst_106 {dimension_numbers = #tpu.dot_dimension_numbers<[1], [0], [0], [1], [0, 0, 1, 1], [], []>} : vector<2x256xbf16>, vector<256x128xbf16>, vector<2x128xf32> -> vector<2x128xf32>
    %c3 = arith.constant 3 : index
    %c0_107 = arith.constant 0 : index
    %335 = vector.load %arg3[%c3, %c0_107] : memref<8x512xf32, #tpu.memory_space<vmem>>, vector<1x128xf32>
    %336 = vector.broadcast %335 : vector<1x128xf32> to vector<2x128xf32>
    %337 = arith.addf %334, %336 : vector<2x128xf32>
    %cst_108 = arith.constant 0.000000e+00 : f32
    %338 = vector.broadcast %cst_108 : f32 to vector<2x128xf32>
    %339 = arith.maximumf %337, %338 : vector<2x128xf32>
    %340 = arith.truncf %339 : vector<2x128xf32> to vector<2x128xbf16>
    %c520 = arith.constant 520 : index
    %c0_109 = arith.constant 0 : index
    %341 = vector.load %arg1[%c520, %c0_109] : memref<776x128xbf16, #tpu.memory_space<vmem>>, vector<128x128xbf16>
    %cst_110 = arith.constant dense<0.000000e+00> : vector<2x128xf32>
    %342 = tpu.matmul %340, %341, %cst_110 {dimension_numbers = #tpu.dot_dimension_numbers<[1], [0], [0], [1], [0, 0, 1, 1], [], []>} : vector<2x128xbf16>, vector<128x128xbf16>, vector<2x128xf32> -> vector<2x128xf32>
    %c4 = arith.constant 4 : index
    %c0_111 = arith.constant 0 : index
    %343 = vector.load %arg3[%c4, %c0_111] : memref<8x512xf32, #tpu.memory_space<vmem>>, vector<1x128xf32>
    %344 = vector.broadcast %343 : vector<1x128xf32> to vector<2x128xf32>
    %345 = arith.addf %342, %344 : vector<2x128xf32>
    %cst_112 = arith.constant 0.000000e+00 : f32
    %346 = vector.broadcast %cst_112 : f32 to vector<2x128xf32>
    %347 = arith.maximumf %345, %346 : vector<2x128xf32>
    %348 = arith.truncf %347 : vector<2x128xf32> to vector<2x128xbf16>
    %c648 = arith.constant 648 : index
    %c0_113 = arith.constant 0 : index
    %349 = vector.load %arg1[%c648, %c0_113] : memref<776x128xbf16, #tpu.memory_space<vmem>>, vector<128x128xbf16>
    %cst_114 = arith.constant dense<0.000000e+00> : vector<2x128xf32>
    %350 = tpu.matmul %348, %349, %cst_114 {dimension_numbers = #tpu.dot_dimension_numbers<[1], [0], [0], [1], [0, 0, 1, 1], [], []>} : vector<2x128xbf16>, vector<128x128xbf16>, vector<2x128xf32> -> vector<2x128xf32>
    %c5 = arith.constant 5 : index
    %c0_115 = arith.constant 0 : index
    %351 = vector.load %arg3[%c5, %c0_115] : memref<8x512xf32, #tpu.memory_space<vmem>>, vector<1x128xf32>
    %352 = vector.broadcast %351 : vector<1x128xf32> to vector<2x128xf32>
    %353 = arith.addf %350, %352 : vector<2x128xf32>
    %354 = math.tanh %353 : vector<2x128xf32>
    %c0_116 = arith.constant 0 : index
    %c0_117 = arith.constant 0 : index
    %355 = vector.load %arg4[%c0_116, %c0_117] : memref<2x128xf32, #tpu.memory_space<vmem>>, vector<2x128xf32>
    tpu.vector_store %arg4[%c0_116, %c0_117], %354 {strides = array<i32>} : memref<2x128xf32, #tpu.memory_space<vmem>>, vector<2x128xf32>,
    return
  }
}

</mosaic_0001>

<llo_original>
// kernel: touch_emotion_mapper.1
$region0: #{touch_emotion_mapper.1}
  #allocation0 [shape = 'u32[]', space=smem, size = 0x4, offset = 0x4, fixed_abs, tag = 'smem constant byte address 0x4 - core index']
  #allocation1 [shape = 'u32[144,128]{1,0:T(1,128)}', space=vmem, size = 0x12000, scoped, tag = 'internal scratch']
  %s0 = inlined_call_operand.vmem [shape: f32[32,16], index: 0, kind: input, shape index: {}]
  %s1 = inlined_call_operand.hbm [shape: bf16[776,128], index: 1, kind: input, shape index: {}]
  %s2 = inlined_call_operand.vmem [shape: bf16[48,512], index: 2, kind: input, shape index: {}]
  %s3 = inlined_call_operand.vmem [shape: f32[8,512], index: 3, kind: input, shape index: {}]
  %s4 = inlined_call_operand.hbm [shape: f32[2,128], index: 4, kind: output, shape index: {}]
  %s5 = sld [smem:[#allocation0]]
  $region30: #{touch_emotion_mapper.1} parent=0
    _
  %s7 = ssub.s32 1, %s5
  %s8 = scalar_select 0, %s7, %s5
  $region1: #{touch_emotion_mapper.1} parent=0
    #allocation2 [shape = 'u8[198656]{0}', space=vmem, size = 0x30800, scoped, tag = 'input window, operand 1, single buffered']
    #allocation3 [shape = 's32[1]{0}', space=sflag, size = 0x4, scoped, tag = 'scoped memory for touch_emotion_mapper.1']
    #allocation4 [shape = 's32[1]{0}', space=sflag, size = 0x4, scoped, tag = 'scoped memory for touch_emotion_mapper.1']
    #allocation5 [shape = 'u8[1024]{0}', space=vmem, size = 0x400, scoped, tag = 'output window, operand 0, single buffered']
    %9 = vsyncpa [#allocation3], 0
    %10 = vsyncpa [#allocation4], 0
    // Predicated region
    $region2: #{touch_emotion_mapper.1} parent=1 // pred_check
      _
    $region3: #{touch_emotion_mapper.1} parent=1 // pred_check_branch
      %12 = sbr.rel (0) target = $region5
    $region4: #{touch_emotion_mapper.1} parent=1 // pred_region
      _
    $region5: #{touch_emotion_mapper.1} parent=1 // pred_fallthru
      _
    // Predicated region
    $region6: #{touch_emotion_mapper.1} parent=1 // pred_check
      _
    $region7: #{touch_emotion_mapper.1} parent=1 // pred_check_branch
      %14 = sbr.rel (0) target = $region9
    $region8: #{touch_emotion_mapper.1} parent=1 // pred_region
      %s16 = ssub.s32 6208, 6208
      %17 = vsyncadd [#allocation3], %s16
      %s18 = sshll.u32 [#allocation2], 4
      %s19 = int_to_ptr.vmem [resolvable:$true] %s18
      %24 = dma.hbm_to_vmem [thread:$0]  %s1, 6208, %s19, [#allocation3], 64, 64, 4
    $region9: #{touch_emotion_mapper.1} parent=1 // pred_fallthru
      _
    // Predicated region
    $region10: #{touch_emotion_mapper.1} parent=1 // pred_check
      _
    $region11: #{touch_emotion_mapper.1} parent=1 // pred_check_branch
      %26 = sbr.rel (0) target = $region13
    $region12: #{touch_emotion_mapper.1} parent=1 // pred_region
      _
    $region13: #{touch_emotion_mapper.1} parent=1 // pred_fallthru
      _
    // Predicated region
    $region14: #{touch_emotion_mapper.1} parent=1 // pred_check
      _
    $region15: #{touch_emotion_mapper.1} parent=1 // pred_check_branch
      %28 = sbr.rel (0) target = $region17
    $region16: #{touch_emotion_mapper.1} parent=1 // pred_region
      _
    $region17: #{touch_emotion_mapper.1} parent=1 // pred_fallthru
      _
    // Predicated region
    $region18: #{touch_emotion_mapper.1} parent=1 // pred_check
      _
    $region19: #{touch_emotion_mapper.1} parent=1 // pred_check_branch
      %30 = sbr.rel (0) target = $region21
    $region20: #{touch_emotion_mapper.1} parent=1 // pred_region
      %31 = dma.done [#allocation3], 6208
    $region21: #{touch_emotion_mapper.1} parent=1 // pred_fallthru
      _
    %v33 = vld [vmem:[%s0] sm:$0xff]
    %v34 = vld [vmem:[%s0 + $0x8] sm:$0xff]
    %v35 = vpack.c.bf16 %v34, %v33
    %v36 = vld [vmem:[#allocation2] sm:$0xf]
    %v37 = vld [vmem:[%s3] ss:$0 sm:$0xff]
    %vm38 = vcmask 64512
    %v40 = vsel %vm38, %v35, 0
    %vm42 = vcmask 1043456
    %v44 = vsel %vm42, %v36, 0
    %46 = vmatprep.subr.bf16.mxu0 0
    %47 = vmatpush1.bf16.msra.mxu0 %v44
    %48 = vmatprep.subr.bf16.mxu0 0
    %49 = vmatpush1.bf16.msra.mxu0 0
    %50 = vmatprep.subr.bf16.mxu0 0
    %51 = vmatpush1.bf16.msra.mxu0 0
    %52 = vmatprep.subr.bf16.mxu0 0
    %53 = vmatpush1.bf16.msra.mxu0 0
    %54 = vmatprep.subr.bf16.mxu0 0
    %55 = vmatpush1.bf16.msra.mxu0 0
    %56 = vmatprep.subr.bf16.mxu0 0
    %57 = vmatpush1.bf16.msra.mxu0 0
    %58 = vmatprep.subr.bf16.mxu0 0
    %59 = vmatpush1.bf16.msra.mxu0 0
    %60 = vmatprep.subr.bf16.mxu0 0
    %61 = vmatpush1.bf16.msra.mxu0 0
    %62 = vmatprep.subr.bf16.mxu0 0
    %63 = vmatpush1.bf16.msra.mxu0 0
    %64 = vmatprep.subr.bf16.mxu0 0
    %65 = vmatpush1.bf16.msra.mxu0 0
    %66 = vmatprep.subr.bf16.mxu0 0
    %67 = vmatpush1.bf16.msra.mxu0 0
    %68 = vmatprep.subr.bf16.mxu0 0
    %69 = vmatpush1.bf16.msra.mxu0 0
    %70 = vmatprep.subr.bf16.mxu0 0
    %71 = vmatpush1.bf16.msra.mxu0 0
    %72 = vmatprep.subr.bf16.mxu0 0
    %73 = vmatpush1.bf16.msra.mxu0 0
    %74 = vmatprep.subr.bf16.mxu0 0
    %75 = vmatpush1.bf16.msra.mxu0 0
    %76 = vmatprep.subr.bf16.mxu0 0
    %77 = vmatpush1.bf16.msra.mxu0 0
    %78 = vmatprep.mubr.bf16.mxu0 0
    %79 = vmatmul.mubr.bf16.gmra.mrb[0].mxu0 %v40
    %v80 = vpop.f32.mrb[0].mxu0
    %v81 = vadd.f32 %v37, %v80
    %v82 = vpop.f32.mrb[0].mxu0
    %v83 = vpop.f32.mrb[0].mxu0
    %v84 = vadd.f32 %v37, %v83
    %v85 = vpop.f32.mrb[0].mxu0
    %86 = vdwg.mxu0
    %v87 = vmax.f32 %v81, 0.0
    %v88 = vmax.f32 %v84, 0.0
    %v89 = vpack.c.bf16 %v88, %v87
    %v90 = vld [vmem:[#allocation2 + $0x4] sm:$0xf]
    %v91 = vld [vmem:[#allocation2 + $0x8] sm:$0xf]
    %v92 = vld [vmem:[#allocation2 + $0xc] sm:$0xf]
    %v93 = vld [vmem:[#allocation2 + $0x10] sm:$0xf]
    %v94 = vld [vmem:[#allocation2 + $0x14] sm:$0xf]
    %v95 = vld [vmem:[#allocation2 + $0x18] sm:$0xf]
    %v96 = vld [vmem:[#allocation2 + $0x1c] sm:$0xf]
    %v97 = vld [vmem:[#allocation2 + $0x20] sm:$0xf]
    %v98 = vld [vmem:[#allocation2 + $0x24] sm:$0xf]
    %v99 = vld [vmem:[#allocation2 + $0x28] sm:$0xf]
    %v100 = vld [vmem:[#allocation2 + $0x2c] sm:$0xf]
    %v101 = vld [vmem:[#allocation2 + $0x30] sm:$0xf]
    %v102 = vld [vmem:[#allocation2 + $0x34] sm:$0xf]
    %v103 = vld [vmem:[#allocation2 + $0x38] sm:$0xf]
    %v104 = vld [vmem:[#allocation2 + $0x3c] sm:$0xf]
    %v105 = vld [vmem:[#allocation2 + $0x40] sm:$0xf]
    %v106 = vld [vmem:[%s3 + $0x1] ss:$0 sm:$0xff]
    %v123 = vunpack.c.l.b16 %v90
    %v124 = vunpack.c.l.b16 %v91
    %v125 = vunpack.c.l.b16 %v92
    %v126 = vunpack.c.l.b16 %v93
    %v127 = vunpack.c.l.b16 %v94
    %v128 = vunpack.c.l.b16 %v95
    %v129 = vunpack.c.l.b16 %v96
    %v130 = vunpack.c.l.b16 %v97
    %v131 = vunpack.c.l.b16 %v98
    %v132 = vunpack.c.l.b16 %v99
    %v133 = vunpack.c.l.b16 %v100
    %v134 = vunpack.c.l.b16 %v101
    %v135 = vunpack.c.l.b16 %v102
    %v136 = vunpack.c.l.b16 %v103
    %v137 = vunpack.c.l.b16 %v104
    %v138 = vunpack.c.l.b16 %v105
    %v139 = vpack.c.b16 %v124, %v123
    %v140 = vpack.c.b16 %v126, %v125
    %v141 = vpack.c.b16 %v128, %v127
    %v142 = vpack.c.b16 %v130, %v129
    %v143 = vpack.c.b16 %v132, %v131
    %v144 = vpack.c.b16 %v134, %v133
    %v145 = vpack.c.b16 %v136, %v135
    %v146 = vpack.c.b16 %v138, %v137
    %155 = vmatprep.subr.bf16.mxu0 0
    %156 = vmatpush1.bf16.msra.mxu0 %v139
    %157 = vmatprep.subr.bf16.mxu0 0
    %158 = vmatpush1.bf16.msra.mxu0 %v140
    %159 = vmatprep.subr.bf16.mxu0 0
    %160 = vmatpush1.bf16.msra.mxu0 %v141
    %161 = vmatprep.subr.bf16.mxu0 0
    %162 = vmatpush1.bf16.msra.mxu0 %v142
    %163 = vmatprep.subr.bf16.mxu0 0
    %164 = vmatpush1.bf16.msra.mxu0 %v143
    %165 = vmatprep.subr.bf16.mxu0 0
    %166 = vmatpush1.bf16.msra.mxu0 %v144
    %167 = vmatprep.subr.bf16.mxu0 0
    %168 = vmatpush1.bf16.msra.mxu0 %v145
    %169 = vmatprep.subr.bf16.mxu0 0
    %170 = vmatpush1.bf16.msra.mxu0 %v146
    %171 = vmatprep.subr.bf16.mxu0 0
    %172 = vmatpush1.bf16.msra.mxu0 0
    %173 = vmatprep.subr.bf16.mxu0 0
    %174 = vmatpush1.bf16.msra.mxu0 0
    %175 = vmatprep.subr.bf16.mxu0 0
    %176 = vmatpush1.bf16.msra.mxu0 0
    %177 = vmatprep.subr.bf16.mxu0 0
    %178 = vmatpush1.bf16.msra.mxu0 0
    %179 = vmatprep.subr.bf16.mxu0 0
    %180 = vmatpush1.bf16.msra.mxu0 0
    %181 = vmatprep.subr.bf16.mxu0 0
    %182 = vmatpush1.bf16.msra.mxu0 0
    %183 = vmatprep.subr.bf16.mxu0 0
    %184 = vmatpush1.bf16.msra.mxu0 0
    %185 = vmatprep.subr.bf16.mxu0 0
    %186 = vmatpush1.bf16.msra.mxu0 0
    %187 = vmatprep.mubr.bf16.mxu0 0
    %188 = vmatmul.mubr.bf16.gmra.mrb[0].mxu0 %v89
    %v189 = vpop.f32.mrb[0].mxu0
    %v190 = vadd.f32 %v106, %v189
    %v191 = vpop.f32.mrb[0].mxu0
    %v192 = vpop.f32.mrb[0].mxu0
    %v193 = vadd.f32 %v106, %v192
    %v194 = vpop.f32.mrb[0].mxu0
    %195 = vdwg.mxu0
    %v196 = vmax.f32 %v190, 0.0
    %v197 = vmax.f32 %v193, 0.0
    %v198 = vpack.c.bf16 %v197, %v196
    %v199 = vld [vmem:[#allocation2 + $0x44] sm:$0xf]
    %v200 = vld [vmem:[#allocation2 + $0x48] sm:$0xf]
    %v201 = vld [vmem:[#allocation2 + $0x4c] sm:$0xf]
    %v202 = vld [vmem:[#allocation2 + $0x50] sm:$0xf]
    %v203 = vld [vmem:[#allocation2 + $0x54] sm:$0xf]
    %v204 = vld [vmem:[#allocation2 + $0x58] sm:$0xf]
    %v205 = vld [vmem:[#allocation2 + $0x5c] sm:$0xf]
    %v206 = vld [vmem:[#allocation2 + $0x60] sm:$0xf]
    %v207 = vld [vmem:[#allocation2 + $0x64] sm:$0xf]
    %v208 = vld [vmem:[#allocation2 + $0x68] sm:$0xf]
    %v209 = vld [vmem:[#allocation2 + $0x6c] sm:$0xf]
    %v210 = vld [vmem:[#allocation2 + $0x70] sm:$0xf]
    %v211 = vld [vmem:[#allocation2 + $0x74] sm:$0xf]
    %v212 = vld [vmem:[#allocation2 + $0x78] sm:$0xf]
    %v213 = vld [vmem:[#allocation2 + $0x7c] sm:$0xf]
    %v214 = vld [vmem:[#allocation2 + $0x80] sm:$0xf]
    %v215 = vld [vmem:[%s3 + $0x2] ss:$0 sm:$0xff]
    %v232 = vunpack.c.l.b16 %v199
    %v233 = vunpack.c.l.b16 %v200
    %v234 = vunpack.c.l.b16 %v201
    %v235 = vunpack.c.l.b16 %v202
    %v236 = vunpack.c.l.b16 %v203
    %v237 = vunpack.c.l.b16 %v204
    %v238 = vunpack.c.l.b16 %v205
    %v239 = vunpack.c.l.b16 %v206
    %v240 = vunpack.c.l.b16 %v207
    %v241 = vunpack.c.l.b16 %v208
    %v242 = vunpack.c.l.b16 %v209
    %v243 = vunpack.c.l.b16 %v210
    %v244 = vunpack.c.l.b16 %v211
    %v245 = vunpack.c.l.b16 %v212
    %v246 = vunpack.c.l.b16 %v213
    %v247 = vunpack.c.l.b16 %v214
    %v248 = vpack.c.b16 %v233, %v232
    %v249 = vpack.c.b16 %v235, %v234
    %v250 = vpack.c.b16 %v237, %v236
    %v251 = vpack.c.b16 %v239, %v238
    %v252 = vpack.c.b16 %v241, %v240
    %v253 = vpack.c.b16 %v243, %v242
    %v254 = vpack.c.b16 %v245, %v244
    %v255 = vpack.c.b16 %v247, %v246
    %264 = vmatprep.subr.bf16.mxu0 0
    %265 = vmatpush1.bf16.msra.mxu0 %v248
    %266 = vmatprep.subr.bf16.mxu0 0
    %267 = vmatpush1.bf16.msra.mxu0 %v249
    %268 = vmatprep.subr.bf16.mxu0 0
    %269 = vmatpush1.bf16.msra.mxu0 %v250
    %270 = vmatprep.subr.bf16.mxu0 0
    %271 = vmatpush1.bf16.msra.mxu0 %v251
    %272 = vmatprep.subr.bf16.mxu0 0
    %273 = vmatpush1.bf16.msra.mxu0 %v252
    %274 = vmatprep.subr.bf16.mxu0 0
    %275 = vmatpush1.bf16.msra.mxu0 %v253
    %276 = vmatprep.subr.bf16.mxu0 0
    %277 = vmatpush1.bf16.msra.mxu0 %v254
    %278 = vmatprep.subr.bf16.mxu0 0
    %279 = vmatpush1.bf16.msra.mxu0 %v255
    %280 = vmatprep.subr.bf16.mxu0 0
    %281 = vmatpush1.bf16.msra.mxu0 0
    %282 = vmatprep.subr.bf16.mxu0 0
    %283 = vmatpush1.bf16.msra.mxu0 0
    %284 = vmatprep.subr.bf16.mxu0 0
    %285 = vmatpush1.bf16.msra.mxu0 0
    %286 = vmatprep.subr.bf16.mxu0 0
    %287 = vmatpush1.bf16.msra.mxu0 0
    %288 = vmatprep.subr.bf16.mxu0 0
    %289 = vmatpush1.bf16.msra.mxu0 0
    %290 = vmatprep.subr.bf16.mxu0 0
    %291 = vmatpush1.bf16.msra.mxu0 0
    %292 = vmatprep.subr.bf16.mxu0 0
    %293 = vmatpush1.bf16.msra.mxu0 0
    %294 = vmatprep.subr.bf16.mxu0 0
    %295 = vmatpush1.bf16.msra.mxu0 0
    %296 = vmatprep.mubr.bf16.mxu0 0
    %297 = vmatmul.mubr.bf16.gmra.mrb[0].mxu0 %v198
    %v298 = vpop.f32.mrb[0].mxu0
    %v299 = vadd.f32 %v215, %v298
    %v300 = vpop.f32.mrb[0].mxu0
    %v301 = vpop.f32.mrb[0].mxu0
    %v302 = vadd.f32 %v215, %v301
    %v303 = vpop.f32.mrb[0].mxu0
    %304 = vdwg.mxu0
    %v305 = vtanh.pop %v299
    %v306 = vtanh.pop %v302
    %v307 = vrot.slane %v305, 4
    %v308 = vadd.f32 %v305, %v307
    %v309 = vrot.slane %v308, 2
    %v310 = vadd.f32 %v308, %v309
    %v311 = vrot.slane %v310, 1
    %v312 = vadd.f32 %v310, %v311
    %v313 = vrot.slane %v306, 4
    %v314 = vadd.f32 %v306, %v313
    %v315 = vrot.slane %v314, 2
    %v316 = vadd.f32 %v314, %v315
    %v317 = vrot.slane %v316, 1
    %v318 = vadd.f32 %v316, %v317
    %vm319 = vcmask 1040384
    %v320 = vsel %vm319, %v312, %v318
    %v321 = vmul.f32 %v320, 0.125
    %v322 = vld [vmem:[%s0 + $0x10] sm:$0xff]
    %v323 = vld [vmem:[%s0 + $0x18] sm:$0xff]
    %v324 = vpack.c.bf16 %v323, %v322
    %v325 = vld [vmem:[%s2] sm:$0xff]
    %v326 = vld [vmem:[%s2 + $0x8] sm:$0xff]
    %v327 = vld [vmem:[%s2 + $0x10] sm:$0xff]
    %v328 = vld [vmem:[%s2 + $0x18] sm:$0xff]
    %s329 = scalar_lea.vmem %s3, 6
    %v330 = vld [vmem:[%s329] ss:$8 sm:$0xf]
    %v332 = vlaneseq
    %v333 = vshrl.u32 %v332, 7
    %v334 = vsub.s32 0, %v333
    %v335 = vrot.slane %v330, %v334
    %v336 = vlaneseq
    %v337 = vshrl.u32 %v336, 7
    %v338 = vsub.s32 1, %v337
    %v339 = vrot.slane %v330, %v338
    %v340 = vlaneseq
    %v341 = vshrl.u32 %v340, 7
    %v342 = vsub.s32 2, %v341
    %v343 = vrot.slane %v330, %v342
    %v344 = vlaneseq
    %v345 = vshrl.u32 %v344, 7
    %v346 = vsub.s32 3, %v345
    %v347 = vrot.slane %v330, %v346
    %v356 = vunpack.c.l.b16 %v325
    %v357 = vunpack.c.h.b16 %v325
    %v358 = vunpack.c.l.b16 %v326
    %v359 = vunpack.c.h.b16 %v326
    %v360 = vunpack.c.l.b16 %v327
    %v361 = vunpack.c.h.b16 %v327
    %v362 = vunpack.c.l.b16 %v328
    %v363 = vunpack.c.h.b16 %v328
    %v364 = vpack.c.b16 %v360, %v356
    %v365 = vpack.c.b16 %v361, %v357
    %v366 = vpack.c.b16 %v362, %v358
    %v367 = vpack.c.b16 %v363, %v359
    %vm372 = vcmask 130048
    %v374 = vsel %vm372, %v324, 0
    %376 = vmatprep.subr.bf16.mxu0 %v365
    %377 = vmatpush1.bf16.msra.mxu0 %v364
    %378 = vmatprep.subr.bf16.mxu0 0
    %379 = vmatpush1.bf16.msra.mxu0 0
    %380 = vmatprep.subr.bf16.mxu0 0
    %381 = vmatpush1.bf16.msra.mxu0 0
    %382 = vmatprep.subr.bf16.mxu0 0
    %383 = vmatpush1.bf16.msra.mxu0 0
    %384 = vmatprep.subr.bf16.mxu0 0
    %385 = vmatpush1.bf16.msra.mxu0 0
    %386 = vmatprep.subr.bf16.mxu0 0
    %387 = vmatpush1.bf16.msra.mxu0 0
    %388 = vmatprep.subr.bf16.mxu0 0
    %389 = vmatpush1.bf16.msra.mxu0 0
    %390 = vmatprep.subr.bf16.mxu0 0
    %391 = vmatpush1.bf16.msra.mxu0 0
    %392 = vmatprep.subr.bf16.mxu0 0
    %393 = vmatpush1.bf16.msra.mxu0 0
    %394 = vmatprep.subr.bf16.mxu0 0
    %395 = vmatpush1.bf16.msra.mxu0 0
    %396 = vmatprep.subr.bf16.mxu0 0
    %397 = vmatpush1.bf16.msra.mxu0 0
    %398 = vmatprep.subr.bf16.mxu0 0
    %399 = vmatpush1.bf16.msra.mxu0 0
    %400 = vmatprep.subr.bf16.mxu0 0
    %401 = vmatpush1.bf16.msra.mxu0 0
    %402 = vmatprep.subr.bf16.mxu0 0
    %403 = vmatpush1.bf16.msra.mxu0 0
    %404 = vmatprep.subr.bf16.mxu0 0
    %405 = vmatpush1.bf16.msra.mxu0 0
    %406 = vmatprep.subr.bf16.mxu0 0
    %407 = vmatpush1.bf16.msra.mxu0 0
    %408 = vmatprep.mubr.bf16.mxu0 0
    %409 = vmatmul.mubr.bf16.gmra.mrb[0].mxu0 %v374
    %v410 = vpop.f32.mrb[0].mxu0
    %v411 = vadd.f32 %v335, %v410
    %v412 = vpop.f32.mrb[0].mxu0
    %v413 = vadd.f32 %v339, %v412
    %v414 = vpop.f32.mrb[0].mxu0
    %v415 = vadd.f32 %v335, %v414
    %v416 = vpop.f32.mrb[0].mxu0
    %v417 = vadd.f32 %v339, %v416
    %418 = vdwg.mxu0
    %419 = vmatprep.subr.bf16.mxu0 %v367
    %420 = vmatpush1.bf16.msra.mxu0 %v366
    %421 = vmatprep.subr.bf16.mxu0 0
    %422 = vmatpush1.bf16.msra.mxu0 0
    %423 = vmatprep.subr.bf16.mxu0 0
    %424 = vmatpush1.bf16.msra.mxu0 0
    %425 = vmatprep.subr.bf16.mxu0 0
    %426 = vmatpush1.bf16.msra.mxu0 0
    %427 = vmatprep.subr.bf16.mxu0 0
    %428 = vmatpush1.bf16.msra.mxu0 0
    %429 = vmatprep.subr.bf16.mxu0 0
    %430 = vmatpush1.bf16.msra.mxu0 0
    %431 = vmatprep.subr.bf16.mxu0 0
    %432 = vmatpush1.bf16.msra.mxu0 0
    %433 = vmatprep.subr.bf16.mxu0 0
    %434 = vmatpush1.bf16.msra.mxu0 0
    %435 = vmatprep.subr.bf16.mxu0 0
    %436 = vmatpush1.bf16.msra.mxu0 0
    %437 = vmatprep.subr.bf16.mxu0 0
    %438 = vmatpush1.bf16.msra.mxu0 0
    %439 = vmatprep.subr.bf16.mxu0 0
    %440 = vmatpush1.bf16.msra.mxu0 0
    %441 = vmatprep.subr.bf16.mxu0 0
    %442 = vmatpush1.bf16.msra.mxu0 0
    %443 = vmatprep.subr.bf16.mxu0 0
    %444 = vmatpush1.bf16.msra.mxu0 0
    %445 = vmatprep.subr.bf16.mxu0 0
    %446 = vmatpush1.bf16.msra.mxu0 0
    %447 = vmatprep.subr.bf16.mxu0 0
    %448 = vmatpush1.bf16.msra.mxu0 0
    %449 = vmatprep.subr.bf16.mxu0 0
    %450 = vmatpush1.bf16.msra.mxu0 0
    %451 = vmatprep.mubr.bf16.mxu0 0
    %452 = vmatmul.mubr.bf16.gmra.mrb[0].mxu0 %v374
    %v453 = vpop.f32.mrb[0].mxu0
    %v454 = vadd.f32 %v343, %v453
    %v455 = vpop.f32.mrb[0].mxu0
    %v456 = vadd.f32 %v347, %v455
    %v457 = vpop.f32.mrb[0].mxu0
    %v458 = vadd.f32 %v343, %v457
    %v459 = vpop.f32.mrb[0].mxu0
    %v460 = vadd.f32 %v347, %v459
    %461 = vdwg.mxu0
    %v462 = vld [vmem:[%s2 + $0x20] sm:$0xff]
    %v463 = vld [vmem:[%s2 + $0x28] sm:$0xff]
    %v464 = vld [vmem:[%s2 + $0x30] sm:$0xff]
    %v465 = vld [vmem:[%s2 + $0x38] sm:$0xff]
    %v466 = vld [vmem:[%s2 + $0x40] sm:$0xff]
    %v467 = vld [vmem:[%s2 + $0x48] sm:$0xff]
    %v468 = vld [vmem:[%s2 + $0x50] sm:$0xff]
    %v469 = vld [vmem:[%s2 + $0x58] sm:$0xff]
    %v478 = vunpack.c.l.b16 %v462
    %v479 = vunpack.c.h.b16 %v462
    %v480 = vunpack.c.l.b16 %v463
    %v481 = vunpack.c.h.b16 %v463
    %v482 = vunpack.c.l.b16 %v464
    %v483 = vunpack.c.h.b16 %v464
    %v484 = vunpack.c.l.b16 %v465
    %v485 = vunpack.c.h.b16 %v465
    %v486 = vunpack.c.l.b16 %v466
    %v487 = vunpack.c.h.b16 %v466
    %v488 = vunpack.c.l.b16 %v467
    %v489 = vunpack.c.h.b16 %v467
    %v490 = vunpack.c.l.b16 %v468
    %v491 = vunpack.c.h.b16 %v468
    %v492 = vunpack.c.l.b16 %v469
    %v493 = vunpack.c.h.b16 %v469
    %v494 = vpack.c.b16 %v482, %v478
    %v495 = vpack.c.b16 %v483, %v479
    %v496 = vpack.c.b16 %v484, %v480
    %v497 = vpack.c.b16 %v485, %v481
    %v498 = vpack.c.b16 %v490, %v486
    %v499 = vpack.c.b16 %v491, %v487
    %v500 = vpack.c.b16 %v492, %v488
    %v501 = vpack.c.b16 %v493, %v489
    %vm510 = vcmask 261120
    %v512 = vsel %vm510, 0, 0
    %514 = vmatprep.subr.bf16.mxu0 %v495
    %515 = vmatpush1.bf16.msra.mxu0 %v494
    %516 = vmatprep.subr.bf16.mxu0 %v499
    %517 = vmatpush1.bf16.msra.mxu0 %v498
    %518 = vmatprep.subr.bf16.mxu0 0
    %519 = vmatpush1.bf16.msra.mxu0 0
    %520 = vmatprep.subr.bf16.mxu0 0
    %521 = vmatpush1.bf16.msra.mxu0 0
    %522 = vmatprep.subr.bf16.mxu0 0
    %523 = vmatpush1.bf16.msra.mxu0 0
    %524 = vmatprep.subr.bf16.mxu0 0
    %525 = vmatpush1.bf16.msra.mxu0 0
    %526 = vmatprep.subr.bf16.mxu0 0
    %527 = vmatpush1.bf16.msra.mxu0 0
    %528 = vmatprep.subr.bf16.mxu0 0
    %529 = vmatpush1.bf16.msra.mxu0 0
    %530 = vmatprep.subr.bf16.mxu0 0
    %531 = vmatpush1.bf16.msra.mxu0 0
    %532 = vmatprep.subr.bf16.mxu0 0
    %533 = vmatpush1.bf16.msra.mxu0 0
    %534 = vmatprep.subr.bf16.mxu0 0
    %535 = vmatpush1.bf16.msra.mxu0 0
    %536 = vmatprep.subr.bf16.mxu0 0
    %537 = vmatpush1.bf16.msra.mxu0 0
    %538 = vmatprep.subr.bf16.mxu0 0
    %539 = vmatpush1.bf16.msra.mxu0 0
    %540 = vmatprep.subr.bf16.mxu0 0
    %541 = vmatpush1.bf16.msra.mxu0 0
    %542 = vmatprep.subr.bf16.mxu0 0
    %543 = vmatpush1.bf16.msra.mxu0 0
    %544 = vmatprep.subr.bf16.mxu0 0
    %545 = vmatpush1.bf16.msra.mxu0 0
    %546 = vmatprep.mubr.bf16.mxu0 0
    %547 = vmatmul.mubr.bf16.gmra.mrb[0].mxu0 %v512
    %v548 = vpop.f32.mrb[0].mxu0
    %v549 = vadd.f32 0.0, %v548
    %v550 = vpop.f32.mrb[0].mxu0
    %v551 = vadd.f32 0.0, %v550
    %v552 = vpop.f32.mrb[0].mxu0
    %v553 = vpop.f32.mrb[0].mxu0
    %554 = vdwg.mxu0
    %555 = vmatprep.subr.bf16.mxu0 %v497
    %556 = vmatpush1.bf16.msra.mxu0 %v496
    %557 = vmatprep.subr.bf16.mxu0 %v501
    %558 = vmatpush1.bf16.msra.mxu0 %v500
    %559 = vmatprep.subr.bf16.mxu0 0
    %560 = vmatpush1.bf16.msra.mxu0 0
    %561 = vmatprep.subr.bf16.mxu0 0
    %562 = vmatpush1.bf16.msra.mxu0 0
    %563 = vmatprep.subr.bf16.mxu0 0
    %564 = vmatpush1.bf16.msra.mxu0 0
    %565 = vmatprep.subr.bf16.mxu0 0
    %566 = vmatpush1.bf16.msra.mxu0 0
    %567 = vmatprep.subr.bf16.mxu0 0
    %568 = vmatpush1.bf16.msra.mxu0 0
    %569 = vmatprep.subr.bf16.mxu0 0
    %570 = vmatpush1.bf16.msra.mxu0 0
    %571 = vmatprep.subr.bf16.mxu0 0
    %572 = vmatpush1.bf16.msra.mxu0 0
    %573 = vmatprep.subr.bf16.mxu0 0
    %574 = vmatpush1.bf16.msra.mxu0 0
    %575 = vmatprep.subr.bf16.mxu0 0
    %576 = vmatpush1.bf16.msra.mxu0 0
    %577 = vmatprep.subr.bf16.mxu0 0
    %578 = vmatpush1.bf16.msra.mxu0 0
    %579 = vmatprep.subr.bf16.mxu0 0
    %580 = vmatpush1.bf16.msra.mxu0 0
    %581 = vmatprep.subr.bf16.mxu0 0
    %582 = vmatpush1.bf16.msra.mxu0 0
    %583 = vmatprep.subr.bf16.mxu0 0
    %584 = vmatpush1.bf16.msra.mxu0 0
    %585 = vmatprep.subr.bf16.mxu0 0
    %586 = vmatpush1.bf16.msra.mxu0 0
    %587 = vmatprep.mubr.bf16.mxu0 0
    %588 = vmatmul.mubr.bf16.gmra.mrb[0].mxu0 %v512
    %v589 = vpop.f32.mrb[0].mxu0
    %v590 = vadd.f32 0.0, %v589
    %v591 = vpop.f32.mrb[0].mxu0
    %v592 = vadd.f32 0.0, %v591
    %v593 = vpop.f32.mrb[0].mxu0
    %v594 = vpop.f32.mrb[0].mxu0
    %595 = vdwg.mxu0
    %v596 = vadd.f32 %v411, %v549
    %v597 = vadd.f32 %v413, %v551
    %v598 = vadd.f32 %v454, %v590
    %v599 = vadd.f32 %v456, %v592
    %v600 = vmul.f32 %v596, 0.5
    %v601 = vtanh.pop %v600
    %v602 = vmul.f32 %v601, 0.5
    %v603 = vadd.f32 %v602, 0.5
    %v604 = vmul.f32 %v597, 0.5
    %v605 = vtanh.pop %v604
    %v606 = vmul.f32 %v605, 0.5
    %v607 = vadd.f32 %v606, 0.5
    %v608 = vtanh.pop %v598
    %v609 = vmul.f32 %v599, 0.5
    %v610 = vtanh.pop %v609
    %v611 = vmul.f32 %v610, 0.5
    %v612 = vadd.f32 %v611, 0.5
    %v613 = vmul.f32 %v607, 0.0
    %v614 = vmul.f32 %v603, %v608
    %v615 = vadd.f32 %v613, %v614
    %v616 = vtanh.pop %v615
    %v617 = vmul.f32 %v612, %v616
    %v618 = vpack.c.bf16 %v617, %v617
    %v620 = vsel %vm510, %v618, 0
    %622 = vmatprep.subr.bf16.mxu0 %v495
    %623 = vmatpush1.bf16.msra.mxu0 %v494
    %624 = vmatprep.subr.bf16.mxu0 %v499
    %625 = vmatpush1.bf16.msra.mxu0 %v498
    %626 = vmatprep.subr.bf16.mxu0 0
    %627 = vmatpush1.bf16.msra.mxu0 0
    %628 = vmatprep.subr.bf16.mxu0 0
    %629 = vmatpush1.bf16.msra.mxu0 0
    %630 = vmatprep.subr.bf16.mxu0 0
    %631 = vmatpush1.bf16.msra.mxu0 0
    %632 = vmatprep.subr.bf16.mxu0 0
    %633 = vmatpush1.bf16.msra.mxu0 0
    %634 = vmatprep.subr.bf16.mxu0 0
    %635 = vmatpush1.bf16.msra.mxu0 0
    %636 = vmatprep.subr.bf16.mxu0 0
    %637 = vmatpush1.bf16.msra.mxu0 0
    %638 = vmatprep.subr.bf16.mxu0 0
    %639 = vmatpush1.bf16.msra.mxu0 0
    %640 = vmatprep.subr.bf16.mxu0 0
    %641 = vmatpush1.bf16.msra.mxu0 0
    %642 = vmatprep.subr.bf16.mxu0 0
    %643 = vmatpush1.bf16.msra.mxu0 0
    %644 = vmatprep.subr.bf16.mxu0 0
    %645 = vmatpush1.bf16.msra.mxu0 0
    %646 = vmatprep.subr.bf16.mxu0 0
    %647 = vmatpush1.bf16.msra.mxu0 0
    %648 = vmatprep.subr.bf16.mxu0 0
    %649 = vmatpush1.bf16.msra.mxu0 0
    %650 = vmatprep.subr.bf16.mxu0 0
    %651 = vmatpush1.bf16.msra.mxu0 0
    %652 = vmatprep.subr.bf16.mxu0 0
    %653 = vmatpush1.bf16.msra.mxu0 0
    %654 = vmatprep.mubr.bf16.mxu0 0
    %655 = vmatmul.mubr.bf16.gmra.mrb[0].mxu0 %v620
    %v656 = vpop.f32.mrb[0].mxu0
    %v657 = vadd.f32 0.0, %v656
    %v658 = vpop.f32.mrb[0].mxu0
    %v659 = vadd.f32 0.0, %v658
    %v660 = vpop.f32.mrb[0].mxu0
    %v661 = vpop.f32.mrb[0].mxu0
    %662 = vdwg.mxu0
    %663 = vmatprep.subr.bf16.mxu0 %v497
    %664 = vmatpush1.bf16.msra.mxu0 %v496
    %665 = vmatprep.subr.bf16.mxu0 %v501
    %666 = vmatpush1.bf16.msra.mxu0 %v500
    %667 = vmatprep.subr.bf16.mxu0 0
    %668 = vmatpush1.bf16.msra.mxu0 0
    %669 = vmatprep.subr.bf16.mxu0 0
    %670 = vmatpush1.bf16.msra.mxu0 0
    %671 = vmatprep.subr.bf16.mxu0 0
    %672 = vmatpush1.bf16.msra.mxu0 0
    %673 = vmatprep.subr.bf16.mxu0 0
    %674 = vmatpush1.bf16.msra.mxu0 0
    %675 = vmatprep.subr.bf16.mxu0 0
    %676 = vmatpush1.bf16.msra.mxu0 0
    %677 = vmatprep.subr.bf16.mxu0 0
    %678 = vmatpush1.bf16.msra.mxu0 0
    %679 = vmatprep.subr.bf16.mxu0 0
    %680 = vmatpush1.bf16.msra.mxu0 0
    %681 = vmatprep.subr.bf16.mxu0 0
    %682 = vmatpush1.bf16.msra.mxu0 0
    %683 = vmatprep.subr.bf16.mxu0 0
    %684 = vmatpush1.bf16.msra.mxu0 0
    %685 = vmatprep.subr.bf16.mxu0 0
    %686 = vmatpush1.bf16.msra.mxu0 0
    %687 = vmatprep.subr.bf16.mxu0 0
    %688 = vmatpush1.bf16.msra.mxu0 0
    %689 = vmatprep.subr.bf16.mxu0 0
    %690 = vmatpush1.bf16.msra.mxu0 0
    %691 = vmatprep.subr.bf16.mxu0 0
    %692 = vmatpush1.bf16.msra.mxu0 0
    %693 = vmatprep.subr.bf16.mxu0 0
    %694 = vmatpush1.bf16.msra.mxu0 0
    %695 = vmatprep.mubr.bf16.mxu0 0
    %696 = vmatmul.mubr.bf16.gmra.mrb[0].mxu0 %v620
    %v697 = vpop.f32.mrb[0].mxu0
    %v698 = vadd.f32 0.0, %v697
    %v699 = vpop.f32.mrb[0].mxu0
    %v700 = vadd.f32 0.0, %v699
    %v701 = vpop.f32.mrb[0].mxu0
    %v702 = vpop.f32.mrb[0].mxu0
    %703 = vdwg.mxu0
    %v708 = vrot.slane %v657, 6
    %v709 = vrot.slane %v659, 6
    %v710 = vrot.slane %v698, 6
    %v711 = vrot.slane %v700, 6
    %v716 = vadd.f32 %v411, %v708
    %v717 = vadd.f32 %v413, %v709
    %v718 = vadd.f32 %v454, %v710
    %v719 = vadd.f32 %v456, %v711
    %v720 = vmul.f32 %v716, 0.5
    %v721 = vtanh.pop %v720
    %v722 = vmul.f32 %v721, 0.5
    %v723 = vadd.f32 %v722, 0.5
    %v724 = vmul.f32 %v717, 0.5
    %v725 = vtanh.pop %v724
    %v726 = vmul.f32 %v725, 0.5
    %v727 = vadd.f32 %v726, 0.5
    %v728 = vtanh.pop %v718
    %v729 = vmul.f32 %v719, 0.5
    %v730 = vtanh.pop %v729
    %v731 = vmul.f32 %v730, 0.5
    %v732 = vadd.f32 %v731, 0.5
    %v734 = vrot.slane %v615, 6
    %v736 = vmul.f32 %v727, %v734
    %v737 = vmul.f32 %v723, %v728
    %v738 = vadd.f32 %v736, %v737
    %v739 = vtanh.pop %v738
    %v740 = vmul.f32 %v732, %v739
    %v741 = vpack.c.bf16 %v740, %v740
    %v743 = vrot.slane %v741, 1
    %v745 = vsel %vm510, %v743, 0
    %747 = vmatprep.subr.bf16.mxu0 %v495
    %748 = vmatpush1.bf16.msra.mxu0 %v494
    %749 = vmatprep.subr.bf16.mxu0 %v499
    %750 = vmatpush1.bf16.msra.mxu0 %v498
    %751 = vmatprep.subr.bf16.mxu0 0
    %752 = vmatpush1.bf16.msra.mxu0 0
    %753 = vmatprep.subr.bf16.mxu0 0
    %754 = vmatpush1.bf16.msra.mxu0 0
    %755 = vmatprep.subr.bf16.mxu0 0
    %756 = vmatpush1.bf16.msra.mxu0 0
    %757 = vmatprep.subr.bf16.mxu0 0
    %758 = vmatpush1.bf16.msra.mxu0 0
    %759 = vmatprep.subr.bf16.mxu0 0
    %760 = vmatpush1.bf16.msra.mxu0 0
    %761 = vmatprep.subr.bf16.mxu0 0
    %762 = vmatpush1.bf16.msra.mxu0 0
    %763 = vmatprep.subr.bf16.mxu0 0
    %764 = vmatpush1.bf16.msra.mxu0 0
    %765 = vmatprep.subr.bf16.mxu0 0
    %766 = vmatpush1.bf16.msra.mxu0 0
    %767 = vmatprep.subr.bf16.mxu0 0
    %768 = vmatpush1.bf16.msra.mxu0 0
    %769 = vmatprep.subr.bf16.mxu0 0
    %770 = vmatpush1.bf16.msra.mxu0 0
    %771 = vmatprep.subr.bf16.mxu0 0
    %772 = vmatpush1.bf16.msra.mxu0 0
    %773 = vmatprep.subr.bf16.mxu0 0
    %774 = vmatpush1.bf16.msra.mxu0 0
    %775 = vmatprep.subr.bf16.mxu0 0
    %776 = vmatpush1.bf16.msra.mxu0 0
    %777 = vmatprep.subr.bf16.mxu0 0
    %778 = vmatpush1.bf16.msra.mxu0 0
    %779 = vmatprep.mubr.bf16.mxu0 0
    %780 = vmatmul.mubr.bf16.gmra.mrb[0].mxu0 %v745
    %v781 = vpop.f32.mrb[0].mxu0
    %v782 = vadd.f32 0.0, %v781
    %v783 = vpop.f32.mrb[0].mxu0
    %v784 = vadd.f32 0.0, %v783
    %v785 = vpop.f32.mrb[0].mxu0
    %v786 = vpop.f32.mrb[0].mxu0
    %787 = vdwg.mxu0
    %788 = vmatprep.subr.bf16.mxu0 %v497
    %789 = vmatpush1.bf16.msra.mxu0 %v496
    %790 = vmatprep.subr.bf16.mxu0 %v501
    %791 = vmatpush1.bf16.msra.mxu0 %v500
    %792 = vmatprep.subr.bf16.mxu0 0
    %793 = vmatpush1.bf16.msra.mxu0 0
    %794 = vmatprep.subr.bf16.mxu0 0
    %795 = vmatpush1.bf16.msra.mxu0 0
    %796 = vmatprep.subr.bf16.mxu0 0
    %797 = vmatpush1.bf16.msra.mxu0 0
    %798 = vmatprep.subr.bf16.mxu0 0
    %799 = vmatpush1.bf16.msra.mxu0 0
    %800 = vmatprep.subr.bf16.mxu0 0
    %801 = vmatpush1.bf16.msra.mxu0 0
    %802 = vmatprep.subr.bf16.mxu0 0
    %803 = vmatpush1.bf16.msra.mxu0 0
    %804 = vmatprep.subr.bf16.mxu0 0
    %805 = vmatpush1.bf16.msra.mxu0 0
    %806 = vmatprep.subr.bf16.mxu0 0
    %807 = vmatpush1.bf16.msra.mxu0 0
    %808 = vmatprep.subr.bf16.mxu0 0
    %809 = vmatpush1.bf16.msra.mxu0 0
    %810 = vmatprep.subr.bf16.mxu0 0
    %811 = vmatpush1.bf16.msra.mxu0 0
    %812 = vmatprep.subr.bf16.mxu0 0
    %813 = vmatpush1.bf16.msra.mxu0 0
    %814 = vmatprep.subr.bf16.mxu0 0
    %815 = vmatpush1.bf16.msra.mxu0 0
    %816 = vmatprep.subr.bf16.mxu0 0
    %817 = vmatpush1.bf16.msra.mxu0 0
    %818 = vmatprep.subr.bf16.mxu0 0
    %819 = vmatpush1.bf16.msra.mxu0 0
    %820 = vmatprep.mubr.bf16.mxu0 0
    %821 = vmatmul.mubr.bf16.gmra.mrb[0].mxu0 %v745
    %v822 = vpop.f32.mrb[0].mxu0
    %v823 = vadd.f32 0.0, %v822
    %v824 = vpop.f32.mrb[0].mxu0
    %v825 = vadd.f32 0.0, %v824
    %v826 = vpop.f32.mrb[0].mxu0
    %v827 = vpop.f32.mrb[0].mxu0
    %828 = vdwg.mxu0
    %v833 = vrot.slane %v782, 4
    %v834 = vrot.slane %v784, 4
    %v835 = vrot.slane %v823, 4
    %v836 = vrot.slane %v825, 4
    %v841 = vadd.f32 %v411, %v833
    %v842 = vadd.f32 %v413, %v834
    %v843 = vadd.f32 %v454, %v835
    %v844 = vadd.f32 %v456, %v836
    %v845 = vmul.f32 %v841, 0.5
    %v846 = vtanh.pop %v845
    %v847 = vmul.f32 %v846, 0.5
    %v848 = vadd.f32 %v847, 0.5
    %v849 = vmul.f32 %v842, 0.5
    %v850 = vtanh.pop %v849
    %v851 = vmul.f32 %v850, 0.5
    %v852 = vadd.f32 %v851, 0.5
    %v853 = vtanh.pop %v843
    %v854 = vmul.f32 %v844, 0.5
    %v855 = vtanh.pop %v854
    %v856 = vmul.f32 %v855, 0.5
    %v857 = vadd.f32 %v856, 0.5
    %v859 = vrot.slane %v738, 6
    %v861 = vmul.f32 %v852, %v859
    %v862 = vmul.f32 %v848, %v853
    %v863 = vadd.f32 %v861, %v862
    %v864 = vtanh.pop %v863
    %v865 = vmul.f32 %v857, %v864
    %v866 = vpack.c.bf16 %v865, %v865
    %v868 = vrot.slane %v866, 2
    %v870 = vsel %vm510, %v868, 0
    %872 = vmatprep.subr.bf16.mxu0 %v495
    %873 = vmatpush1.bf16.msra.mxu0 %v494
    %874 = vmatprep.subr.bf16.mxu0 %v499
    %875 = vmatpush1.bf16.msra.mxu0 %v498
    %876 = vmatprep.subr.bf16.mxu0 0
    %877 = vmatpush1.bf16.msra.mxu0 0
    %878 = vmatprep.subr.bf16.mxu0 0
    %879 = vmatpush1.bf16.msra.mxu0 0
    %880 = vmatprep.subr.bf16.mxu0 0
    %881 = vmatpush1.bf16.msra.mxu0 0
    %882 = vmatprep.subr.bf16.mxu0 0
    %883 = vmatpush1.bf16.msra.mxu0 0
    %884 = vmatprep.subr.bf16.mxu0 0
    %885 = vmatpush1.bf16.msra.mxu0 0
    %886 = vmatprep.subr.bf16.mxu0 0
    %887 = vmatpush1.bf16.msra.mxu0 0
    %888 = vmatprep.subr.bf16.mxu0 0
    %889 = vmatpush1.bf16.msra.mxu0 0
    %890 = vmatprep.subr.bf16.mxu0 0
    %891 = vmatpush1.bf16.msra.mxu0 0
    %892 = vmatprep.subr.bf16.mxu0 0
    %893 = vmatpush1.bf16.msra.mxu0 0
    %894 = vmatprep.subr.bf16.mxu0 0
    %895 = vmatpush1.bf16.msra.mxu0 0
    %896 = vmatprep.subr.bf16.mxu0 0
    %897 = vmatpush1.bf16.msra.mxu0 0
    %898 = vmatprep.subr.bf16.mxu0 0
    %899 = vmatpush1.bf16.msra.mxu0 0
    %900 = vmatprep.subr.bf16.mxu0 0
    %901 = vmatpush1.bf16.msra.mxu0 0
    %902 = vmatprep.subr.bf16.mxu0 0
    %903 = vmatpush1.bf16.msra.mxu0 0
    %904 = vmatprep.mubr.bf16.mxu0 0
    %905 = vmatmul.mubr.bf16.gmra.mrb[0].mxu0 %v870
    %v906 = vpop.f32.mrb[0].mxu0
    %v907 = vadd.f32 0.0, %v906
    %v908 = vpop.f32.mrb[0].mxu0
    %v909 = vadd.f32 0.0, %v908
    %v910 = vpop.f32.mrb[0].mxu0
    %v911 = vpop.f32.mrb[0].mxu0
    %912 = vdwg.mxu0
    %913 = vmatprep.subr.bf16.mxu0 %v497
    %914 = vmatpush1.bf16.msra.mxu0 %v496
    %915 = vmatprep.subr.bf16.mxu0 %v501
    %916 = vmatpush1.bf16.msra.mxu0 %v500
    %917 = vmatprep.subr.bf16.mxu0 0
    %918 = vmatpush1.bf16.msra.mxu0 0
    %919 = vmatprep.subr.bf16.mxu0 0
    %920 = vmatpush1.bf16.msra.mxu0 0
    %921 = vmatprep.subr.bf16.mxu0 0
    %922 = vmatpush1.bf16.msra.mxu0 0
    %923 = vmatprep.subr.bf16.mxu0 0
    %924 = vmatpush1.bf16.msra.mxu0 0
    %925 = vmatprep.subr.bf16.mxu0 0
    %926 = vmatpush1.bf16.msra.mxu0 0
    %927 = vmatprep.subr.bf16.mxu0 0
    %928 = vmatpush1.bf16.msra.mxu0 0
    %929 = vmatprep.subr.bf16.mxu0 0
    %930 = vmatpush1.bf16.msra.mxu0 0
    %931 = vmatprep.subr.bf16.mxu0 0
    %932 = vmatpush1.bf16.msra.mxu0 0
    %933 = vmatprep.subr.bf16.mxu0 0
    %934 = vmatpush1.bf16.msra.mxu0 0
    %935 = vmatprep.subr.bf16.mxu0 0
    %936 = vmatpush1.bf16.msra.mxu0 0
    %937 = vmatprep.subr.bf16.mxu0 0
    %938 = vmatpush1.bf16.msra.mxu0 0
    %939 = vmatprep.subr.bf16.mxu0 0
    %940 = vmatpush1.bf16.msra.mxu0 0
    %941 = vmatprep.subr.bf16.mxu0 0
    %942 = vmatpush1.bf16.msra.mxu0 0
    %943 = vmatprep.subr.bf16.mxu0 0
    %944 = vmatpush1.bf16.msra.mxu0 0
    %945 = vmatprep.mubr.bf16.mxu0 0
    %946 = vmatmul.mubr.bf16.gmra.mrb[0].mxu0 %v870
    %v947 = vpop.f32.mrb[0].mxu0
    %v948 = vadd.f32 0.0, %v947
    %v949 = vpop.f32.mrb[0].mxu0
    %v950 = vadd.f32 0.0, %v949
    %v951 = vpop.f32.mrb[0].mxu0
    %v952 = vpop.f32.mrb[0].mxu0
    %953 = vdwg.mxu0
    %v958 = vrot.slane %v907, 2
    %v959 = vrot.slane %v909, 2
    %v960 = vrot.slane %v948, 2
    %v961 = vrot.slane %v950, 2
    %v966 = vadd.f32 %v411, %v958
    %v967 = vadd.f32 %v413, %v959
    %v968 = vadd.f32 %v454, %v960
    %v969 = vadd.f32 %v456, %v961
    %v970 = vmul.f32 %v966, 0.5
    %v971 = vtanh.pop %v970
    %v972 = vmul.f32 %v971, 0.5
    %v973 = vadd.f32 %v972, 0.5
    %v974 = vmul.f32 %v967, 0.5
    %v975 = vtanh.pop %v974
    %v976 = vmul.f32 %v975, 0.5
    %v977 = vadd.f32 %v976, 0.5
    %v978 = vtanh.pop %v968
    %v979 = vmul.f32 %v969, 0.5
    %v980 = vtanh.pop %v979
    %v981 = vmul.f32 %v980, 0.5
    %v982 = vadd.f32 %v981, 0.5
    %v984 = vrot.slane %v863, 6
    %v986 = vmul.f32 %v977, %v984
    %v987 = vmul.f32 %v973, %v978
    %v988 = vadd.f32 %v986, %v987
    %v989 = vtanh.pop %v988
    %v990 = vmul.f32 %v982, %v989
    %v991 = vpack.c.bf16 %v990, %v990
    %v993 = vrot.slane %v991, 3
    %v995 = vsel %vm510, %v993, 0
    %997 = vmatprep.subr.bf16.mxu0 %v495
    %998 = vmatpush1.bf16.msra.mxu0 %v494
    %999 = vmatprep.subr.bf16.mxu0 %v499
    %1000 = vmatpush1.bf16.msra.mxu0 %v498
    %1001 = vmatprep.subr.bf16.mxu0 0
    %1002 = vmatpush1.bf16.msra.mxu0 0
    %1003 = vmatprep.subr.bf16.mxu0 0
    %1004 = vmatpush1.bf16.msra.mxu0 0
    %1005 = vmatprep.subr.bf16.mxu0 0
    %1006 = vmatpush1.bf16.msra.mxu0 0
    %1007 = vmatprep.subr.bf16.mxu0 0
    %1008 = vmatpush1.bf16.msra.mxu0 0
    %1009 = vmatprep.subr.bf16.mxu0 0
    %1010 = vmatpush1.bf16.msra.mxu0 0
    %1011 = vmatprep.subr.bf16.mxu0 0
    %1012 = vmatpush1.bf16.msra.mxu0 0
    %1013 = vmatprep.subr.bf16.mxu0 0
    %1014 = vmatpush1.bf16.msra.mxu0 0
    %1015 = vmatprep.subr.bf16.mxu0 0
    %1016 = vmatpush1.bf16.msra.mxu0 0
    %1017 = vmatprep.subr.bf16.mxu0 0
    %1018 = vmatpush1.bf16.msra.mxu0 0
    %1019 = vmatprep.subr.bf16.mxu0 0
    %1020 = vmatpush1.bf16.msra.mxu0 0
    %1021 = vmatprep.subr.bf16.mxu0 0
    %1022 = vmatpush1.bf16.msra.mxu0 0
    %1023 = vmatprep.subr.bf16.mxu0 0
    %1024 = vmatpush1.bf16.msra.mxu0 0
    %1025 = vmatprep.subr.bf16.mxu0 0
    %1026 = vmatpush1.bf16.msra.mxu0 0
    %1027 = vmatprep.subr.bf16.mxu0 0
    %1028 = vmatpush1.bf16.msra.mxu0 0
    %1029 = vmatprep.mubr.bf16.mxu0 0
    %1030 = vmatmul.mubr.bf16.gmra.mrb[0].mxu0 %v995
    %v1031 = vpop.f32.mrb[0].mxu0
    %v1032 = vadd.f32 0.0, %v1031
    %v1033 = vpop.f32.mrb[0].mxu0
    %v1034 = vadd.f32 0.0, %v1033
    %v1035 = vpop.f32.mrb[0].mxu0
    %v1036 = vpop.f32.mrb[0].mxu0
    %1037 = vdwg.mxu0
    %1038 = vmatprep.subr.bf16.mxu0 %v497
    %1039 = vmatpush1.bf16.msra.mxu0 %v496
    %1040 = vmatprep.subr.bf16.mxu0 %v501
    %1041 = vmatpush1.bf16.msra.mxu0 %v500
    %1042 = vmatprep.subr.bf16.mxu0 0
    %1043 = vmatpush1.bf16.msra.mxu0 0
    %1044 = vmatprep.subr.bf16.mxu0 0
    %1045 = vmatpush1.bf16.msra.mxu0 0
    %1046 = vmatprep.subr.bf16.mxu0 0
    %1047 = vmatpush1.bf16.msra.mxu0 0
    %1048 = vmatprep.subr.bf16.mxu0 0
    %1049 = vmatpush1.bf16.msra.mxu0 0
    %1050 = vmatprep.subr.bf16.mxu0 0
    %1051 = vmatpush1.bf16.msra.mxu0 0
    %1052 = vmatprep.subr.bf16.mxu0 0
    %1053 = vmatpush1.bf16.msra.mxu0 0
    %1054 = vmatprep.subr.bf16.mxu0 0
    %1055 = vmatpush1.bf16.msra.mxu0 0
    %1056 = vmatprep.subr.bf16.mxu0 0
    %1057 = vmatpush1.bf16.msra.mxu0 0
    %1058 = vmatprep.subr.bf16.mxu0 0
    %1059 = vmatpush1.bf16.msra.mxu0 0
    %1060 = vmatprep.subr.bf16.mxu0 0
    %1061 = vmatpush1.bf16.msra.mxu0 0
    %1062 = vmatprep.subr.bf16.mxu0 0
    %1063 = vmatpush1.bf16.msra.mxu0 0
    %1064 = vmatprep.subr.bf16.mxu0 0
    %1065 = vmatpush1.bf16.msra.mxu0 0
    %1066 = vmatprep.subr.bf16.mxu0 0
    %1067 = vmatpush1.bf16.msra.mxu0 0
    %1068 = vmatprep.subr.bf16.mxu0 0
    %1069 = vmatpush1.bf16.msra.mxu0 0
    %1070 = vmatprep.mubr.bf16.mxu0 0
    %1071 = vmatmul.mubr.bf16.gmra.mrb[0].mxu0 %v995
    %v1072 = vpop.f32.mrb[0].mxu0
    %v1073 = vadd.f32 0.0, %v1072
    %v1074 = vpop.f32.mrb[0].mxu0
    %v1075 = vadd.f32 0.0, %v1074
    %v1076 = vpop.f32.mrb[0].mxu0
    %v1077 = vpop.f32.mrb[0].mxu0
    %1078 = vdwg.mxu0
    %v1079 = vadd.f32 %v415, %v1032
    %v1080 = vadd.f32 %v417, %v1034
    %v1081 = vadd.f32 %v458, %v1073
    %v1082 = vadd.f32 %v460, %v1075
    %v1083 = vmul.f32 %v1079, 0.5
    %v1084 = vtanh.pop %v1083
    %v1085 = vmul.f32 %v1084, 0.5
    %v1086 = vadd.f32 %v1085, 0.5
    %v1087 = vmul.f32 %v1080, 0.5
    %v1088 = vtanh.pop %v1087
    %v1089 = vmul.f32 %v1088, 0.5
    %v1090 = vadd.f32 %v1089, 0.5
    %v1091 = vtanh.pop %v1081
    %v1092 = vmul.f32 %v1082, 0.5
    %v1093 = vtanh.pop %v1092
    %v1094 = vmul.f32 %v1093, 0.5
    %v1095 = vadd.f32 %v1094, 0.5
    %v1097 = vrot.slane %v988, 6
    %v1099 = vmul.f32 %v1090, %v1097
    %v1100 = vmul.f32 %v1086, %v1091
    %v1101 = vadd.f32 %v1099, %v1100
    %v1102 = vtanh.pop %v1101
    %v1103 = vmul.f32 %v1095, %v1102
    %v1104 = vpack.c.bf16 %v1103, %v1103
    %v1106 = vsel %vm510, %v1104, 0
    %1108 = vmatprep.subr.bf16.mxu0 %v495
    %1109 = vmatpush1.bf16.msra.mxu0 %v494
    %1110 = vmatprep.subr.bf16.mxu0 %v499
    %1111 = vmatpush1.bf16.msra.mxu0 %v498
    %1112 = vmatprep.subr.bf16.mxu0 0
    %1113 = vmatpush1.bf16.msra.mxu0 0
    %1114 = vmatprep.subr.bf16.mxu0 0
    %1115 = vmatpush1.bf16.msra.mxu0 0
    %1116 = vmatprep.subr.bf16.mxu0 0
    %1117 = vmatpush1.bf16.msra.mxu0 0
    %1118 = vmatprep.subr.bf16.mxu0 0
    %1119 = vmatpush1.bf16.msra.mxu0 0
    %1120 = vmatprep.subr.bf16.mxu0 0
    %1121 = vmatpush1.bf16.msra.mxu0 0
    %1122 = vmatprep.subr.bf16.mxu0 0
    %1123 = vmatpush1.bf16.msra.mxu0 0
    %1124 = vmatprep.subr.bf16.mxu0 0
    %1125 = vmatpush1.bf16.msra.mxu0 0
    %1126 = vmatprep.subr.bf16.mxu0 0
    %1127 = vmatpush1.bf16.msra.mxu0 0
    %1128 = vmatprep.subr.bf16.mxu0 0
    %1129 = vmatpush1.bf16.msra.mxu0 0
    %1130 = vmatprep.subr.bf16.mxu0 0
    %1131 = vmatpush1.bf16.msra.mxu0 0
    %1132 = vmatprep.subr.bf16.mxu0 0
    %1133 = vmatpush1.bf16.msra.mxu0 0
    %1134 = vmatprep.subr.bf16.mxu0 0
    %1135 = vmatpush1.bf16.msra.mxu0 0
    %1136 = vmatprep.subr.bf16.mxu0 0
    %1137 = vmatpush1.bf16.msra.mxu0 0
    %1138 = vmatprep.subr.bf16.mxu0 0
    %1139 = vmatpush1.bf16.msra.mxu0 0
    %1140 = vmatprep.mubr.bf16.mxu0 0
    %1141 = vmatmul.mubr.bf16.gmra.mrb[0].mxu0 %v1106
    %v1142 = vpop.f32.mrb[0].mxu0
    %v1143 = vadd.f32 0.0, %v1142
    %v1144 = vpop.f32.mrb[0].mxu0
    %v1145 = vadd.f32 0.0, %v1144
    %v1146 = vpop.f32.mrb[0].mxu0
    %v1147 = vpop.f32.mrb[0].mxu0
    %1148 = vdwg.mxu0
    %1149 = vmatprep.subr.bf16.mxu0 %v497
    %1150 = vmatpush1.bf16.msra.mxu0 %v496
    %1151 = vmatprep.subr.bf16.mxu0 %v501
    %1152 = vmatpush1.bf16.msra.mxu0 %v500
    %1153 = vmatprep.subr.bf16.mxu0 0
    %1154 = vmatpush1.bf16.msra.mxu0 0
    %1155 = vmatprep.subr.bf16.mxu0 0
    %1156 = vmatpush1.bf16.msra.mxu0 0
    %1157 = vmatprep.subr.bf16.mxu0 0
    %1158 = vmatpush1.bf16.msra.mxu0 0
    %1159 = vmatprep.subr.bf16.mxu0 0
    %1160 = vmatpush1.bf16.msra.mxu0 0
    %1161 = vmatprep.subr.bf16.mxu0 0
    %1162 = vmatpush1.bf16.msra.mxu0 0
    %1163 = vmatprep.subr.bf16.mxu0 0
    %1164 = vmatpush1.bf16.msra.mxu0 0
    %1165 = vmatprep.subr.bf16.mxu0 0
    %1166 = vmatpush1.bf16.msra.mxu0 0
    %1167 = vmatprep.subr.bf16.mxu0 0
    %1168 = vmatpush1.bf16.msra.mxu0 0
    %1169 = vmatprep.subr.bf16.mxu0 0
    %1170 = vmatpush1.bf16.msra.mxu0 0
    %1171 = vmatprep.subr.bf16.mxu0 0
    %1172 = vmatpush1.bf16.msra.mxu0 0
    %1173 = vmatprep.subr.bf16.mxu0 0
    %1174 = vmatpush1.bf16.msra.mxu0 0
    %1175 = vmatprep.subr.bf16.mxu0 0
    %1176 = vmatpush1.bf16.msra.mxu0 0
    %1177 = vmatprep.subr.bf16.mxu0 0
    %1178 = vmatpush1.bf16.msra.mxu0 0
    %1179 = vmatprep.subr.bf16.mxu0 0
    %1180 = vmatpush1.bf16.msra.mxu0 0
    %1181 = vmatprep.mubr.bf16.mxu0 0
    %1182 = vmatmul.mubr.bf16.gmra.mrb[0].mxu0 %v1106
    %v1183 = vpop.f32.mrb[0].mxu0
    %v1184 = vadd.f32 0.0, %v1183
    %v1185 = vpop.f32.mrb[0].mxu0
    %v1186 = vadd.f32 0.0, %v1185
    %v1187 = vpop.f32.mrb[0].mxu0
    %v1188 = vpop.f32.mrb[0].mxu0
    %1189 = vdwg.mxu0
    %v1194 = vrot.slane %v1143, 6
    %v1195 = vrot.slane %v1145, 6
    %v1196 = vrot.slane %v1184, 6
    %v1197 = vrot.slane %v1186, 6
    %v1202 = vadd.f32 %v415, %v1194
    %v1203 = vadd.f32 %v417, %v1195
    %v1204 = vadd.f32 %v458, %v1196
    %v1205 = vadd.f32 %v460, %v1197
    %v1206 = vmul.f32 %v1202, 0.5
    %v1207 = vtanh.pop %v1206
    %v1208 = vmul.f32 %v1207, 0.5
    %v1209 = vadd.f32 %v1208, 0.5
    %v1210 = vmul.f32 %v1203, 0.5
    %v1211 = vtanh.pop %v1210
    %v1212 = vmul.f32 %v1211, 0.5
    %v1213 = vadd.f32 %v1212, 0.5
    %v1214 = vtanh.pop %v1204
    %v1215 = vmul.f32 %v1205, 0.5
    %v1216 = vtanh.pop %v1215
    %v1217 = vmul.f32 %v1216, 0.5
    %v1218 = vadd.f32 %v1217, 0.5
    %v1220 = vrot.slane %v1101, 6
    %v1222 = vmul.f32 %v1213, %v1220
    %v1223 = vmul.f32 %v1209, %v1214
    %v1224 = vadd.f32 %v1222, %v1223
    %v1225 = vtanh.pop %v1224
    %v1226 = vmul.f32 %v1218, %v1225
    %v1227 = vpack.c.bf16 %v1226, %v1226
    %v1229 = vrot.slane %v1227, 1
    %v1231 = vsel %vm510, %v1229, 0
    %1233 = vmatprep.subr.bf16.mxu0 %v495
    %1234 = vmatpush1.bf16.msra.mxu0 %v494
    %1235 = vmatprep.subr.bf16.mxu0 %v499
    %1236 = vmatpush1.bf16.msra.mxu0 %v498
    %1237 = vmatprep.subr.bf16.mxu0 0
    %1238 = vmatpush1.bf16.msra.mxu0 0
    %1239 = vmatprep.subr.bf16.mxu0 0
    %1240 = vmatpush1.bf16.msra.mxu0 0
    %1241 = vmatprep.subr.bf16.mxu0 0
    %1242 = vmatpush1.bf16.msra.mxu0 0
    %1243 = vmatprep.subr.bf16.mxu0 0
    %1244 = vmatpush1.bf16.msra.mxu0 0
    %1245 = vmatprep.subr.bf16.mxu0 0
    %1246 = vmatpush1.bf16.msra.mxu0 0
    %1247 = vmatprep.subr.bf16.mxu0 0
    %1248 = vmatpush1.bf16.msra.mxu0 0
    %1249 = vmatprep.subr.bf16.mxu0 0
    %1250 = vmatpush1.bf16.msra.mxu0 0
    %1251 = vmatprep.subr.bf16.mxu0 0
    %1252 = vmatpush1.bf16.msra.mxu0 0
    %1253 = vmatprep.subr.bf16.mxu0 0
    %1254 = vmatpush1.bf16.msra.mxu0 0
    %1255 = vmatprep.subr.bf16.mxu0 0
    %1256 = vmatpush1.bf16.msra.mxu0 0
    %1257 = vmatprep.subr.bf16.mxu0 0
    %1258 = vmatpush1.bf16.msra.mxu0 0
    %1259 = vmatprep.subr.bf16.mxu0 0
    %1260 = vmatpush1.bf16.msra.mxu0 0
    %1261 = vmatprep.subr.bf16.mxu0 0
    %1262 = vmatpush1.bf16.msra.mxu0 0
    %1263 = vmatprep.subr.bf16.mxu0 0
    %1264 = vmatpush1.bf16.msra.mxu0 0
    %1265 = vmatprep.mubr.bf16.mxu0 0
    %1266 = vmatmul.mubr.bf16.gmra.mrb[0].mxu0 %v1231
    %v1267 = vpop.f32.mrb[0].mxu0
    %v1268 = vadd.f32 0.0, %v1267
    %v1269 = vpop.f32.mrb[0].mxu0
    %v1270 = vadd.f32 0.0, %v1269
    %v1271 = vpop.f32.mrb[0].mxu0
    %v1272 = vpop.f32.mrb[0].mxu0
    %1273 = vdwg.mxu0
    %1274 = vmatprep.subr.bf16.mxu0 %v497
    %1275 = vmatpush1.bf16.msra.mxu0 %v496
    %1276 = vmatprep.subr.bf16.mxu0 %v501
    %1277 = vmatpush1.bf16.msra.mxu0 %v500
    %1278 = vmatprep.subr.bf16.mxu0 0
    %1279 = vmatpush1.bf16.msra.mxu0 0
    %1280 = vmatprep.subr.bf16.mxu0 0
    %1281 = vmatpush1.bf16.msra.mxu0 0
    %1282 = vmatprep.subr.bf16.mxu0 0
    %1283 = vmatpush1.bf16.msra.mxu0 0
    %1284 = vmatprep.subr.bf16.mxu0 0
    %1285 = vmatpush1.bf16.msra.mxu0 0
    %1286 = vmatprep.subr.bf16.mxu0 0
    %1287 = vmatpush1.bf16.msra.mxu0 0
    %1288 = vmatprep.subr.bf16.mxu0 0
    %1289 = vmatpush1.bf16.msra.mxu0 0
    %1290 = vmatprep.subr.bf16.mxu0 0
    %1291 = vmatpush1.bf16.msra.mxu0 0
    %1292 = vmatprep.subr.bf16.mxu0 0
    %1293 = vmatpush1.bf16.msra.mxu0 0
    %1294 = vmatprep.subr.bf16.mxu0 0
    %1295 = vmatpush1.bf16.msra.mxu0 0
    %1296 = vmatprep.subr.bf16.mxu0 0
    %1297 = vmatpush1.bf16.msra.mxu0 0
    %1298 = vmatprep.subr.bf16.mxu0 0
    %1299 = vmatpush1.bf16.msra.mxu0 0
    %1300 = vmatprep.subr.bf16.mxu0 0
    %1301 = vmatpush1.bf16.msra.mxu0 0
    %1302 = vmatprep.subr.bf16.mxu0 0
    %1303 = vmatpush1.bf16.msra.mxu0 0
    %1304 = vmatprep.subr.bf16.mxu0 0
    %1305 = vmatpush1.bf16.msra.mxu0 0
    %1306 = vmatprep.mubr.bf16.mxu0 0
    %1307 = vmatmul.mubr.bf16.gmra.mrb[0].mxu0 %v1231
    %v1308 = vpop.f32.mrb[0].mxu0
    %v1309 = vadd.f32 0.0, %v1308
    %v1310 = vpop.f32.mrb[0].mxu0
    %v1311 = vadd.f32 0.0, %v1310
    %v1312 = vpop.f32.mrb[0].mxu0
    %v1313 = vpop.f32.mrb[0].mxu0
    %1314 = vdwg.mxu0
    %v1319 = vrot.slane %v1268, 4
    %v1320 = vrot.slane %v1270, 4
    %v1321 = vrot.slane %v1309, 4
    %v1322 = vrot.slane %v1311, 4
    %v1327 = vadd.f32 %v415, %v1319
    %v1328 = vadd.f32 %v417, %v1320
    %v1329 = vadd.f32 %v458, %v1321
    %v1330 = vadd.f32 %v460, %v1322
    %v1331 = vmul.f32 %v1327, 0.5
    %v1332 = vtanh.pop %v1331
    %v1333 = vmul.f32 %v1332, 0.5
    %v1334 = vadd.f32 %v1333, 0.5
    %v1335 = vmul.f32 %v1328, 0.5
    %v1336 = vtanh.pop %v1335
    %v1337 = vmul.f32 %v1336, 0.5
    %v1338 = vadd.f32 %v1337, 0.5
    %v1339 = vtanh.pop %v1329
    %v1340 = vmul.f32 %v1330, 0.5
    %v1341 = vtanh.pop %v1340
    %v1342 = vmul.f32 %v1341, 0.5
    %v1343 = vadd.f32 %v1342, 0.5
    %v1345 = vrot.slane %v1224, 6
    %v1347 = vmul.f32 %v1338, %v1345
    %v1348 = vmul.f32 %v1334, %v1339
    %v1349 = vadd.f32 %v1347, %v1348
    %v1350 = vtanh.pop %v1349
    %v1351 = vmul.f32 %v1343, %v1350
    %v1352 = vpack.c.bf16 %v1351, %v1351
    %v1354 = vrot.slane %v1352, 2
    %v1356 = vsel %vm510, %v1354, 0
    %1358 = vmatprep.subr.bf16.mxu0 %v495
    %1359 = vmatpush1.bf16.msra.mxu0 %v494
    %1360 = vmatprep.subr.bf16.mxu0 %v499
    %1361 = vmatpush1.bf16.msra.mxu0 %v498
    %1362 = vmatprep.subr.bf16.mxu0 0
    %1363 = vmatpush1.bf16.msra.mxu0 0
    %1364 = vmatprep.subr.bf16.mxu0 0
    %1365 = vmatpush1.bf16.msra.mxu0 0
    %1366 = vmatprep.subr.bf16.mxu0 0
    %1367 = vmatpush1.bf16.msra.mxu0 0
    %1368 = vmatprep.subr.bf16.mxu0 0
    %1369 = vmatpush1.bf16.msra.mxu0 0
    %1370 = vmatprep.subr.bf16.mxu0 0
    %1371 = vmatpush1.bf16.msra.mxu0 0
    %1372 = vmatprep.subr.bf16.mxu0 0
    %1373 = vmatpush1.bf16.msra.mxu0 0
    %1374 = vmatprep.subr.bf16.mxu0 0
    %1375 = vmatpush1.bf16.msra.mxu0 0
    %1376 = vmatprep.subr.bf16.mxu0 0
    %1377 = vmatpush1.bf16.msra.mxu0 0
    %1378 = vmatprep.subr.bf16.mxu0 0
    %1379 = vmatpush1.bf16.msra.mxu0 0
    %1380 = vmatprep.subr.bf16.mxu0 0
    %1381 = vmatpush1.bf16.msra.mxu0 0
    %1382 = vmatprep.subr.bf16.mxu0 0
    %1383 = vmatpush1.bf16.msra.mxu0 0
    %1384 = vmatprep.subr.bf16.mxu0 0
    %1385 = vmatpush1.bf16.msra.mxu0 0
    %1386 = vmatprep.subr.bf16.mxu0 0
    %1387 = vmatpush1.bf16.msra.mxu0 0
    %1388 = vmatprep.subr.bf16.mxu0 0
    %1389 = vmatpush1.bf16.msra.mxu0 0
    %1390 = vmatprep.mubr.bf16.mxu0 0
    %1391 = vmatmul.mubr.bf16.gmra.mrb[0].mxu0 %v1356
    %v1392 = vpop.f32.mrb[0].mxu0
    %v1393 = vadd.f32 0.0, %v1392
    %v1394 = vpop.f32.mrb[0].mxu0
    %v1395 = vadd.f32 0.0, %v1394
    %v1396 = vpop.f32.mrb[0].mxu0
    %v1397 = vpop.f32.mrb[0].mxu0
    %1398 = vdwg.mxu0
    %1399 = vmatprep.subr.bf16.mxu0 %v497
    %1400 = vmatpush1.bf16.msra.mxu0 %v496
    %1401 = vmatprep.subr.bf16.mxu0 %v501
    %1402 = vmatpush1.bf16.msra.mxu0 %v500
    %1403 = vmatprep.subr.bf16.mxu0 0
    %1404 = vmatpush1.bf16.msra.mxu0 0
    %1405 = vmatprep.subr.bf16.mxu0 0
    %1406 = vmatpush1.bf16.msra.mxu0 0
    %1407 = vmatprep.subr.bf16.mxu0 0
    %1408 = vmatpush1.bf16.msra.mxu0 0
    %1409 = vmatprep.subr.bf16.mxu0 0
    %1410 = vmatpush1.bf16.msra.mxu0 0
    %1411 = vmatprep.subr.bf16.mxu0 0
    %1412 = vmatpush1.bf16.msra.mxu0 0
    %1413 = vmatprep.subr.bf16.mxu0 0
    %1414 = vmatpush1.bf16.msra.mxu0 0
    %1415 = vmatprep.subr.bf16.mxu0 0
    %1416 = vmatpush1.bf16.msra.mxu0 0
    %1417 = vmatprep.subr.bf16.mxu0 0
    %1418 = vmatpush1.bf16.msra.mxu0 0
    %1419 = vmatprep.subr.bf16.mxu0 0
    %1420 = vmatpush1.bf16.msra.mxu0 0
    %1421 = vmatprep.subr.bf16.mxu0 0
    %1422 = vmatpush1.bf16.msra.mxu0 0
    %1423 = vmatprep.subr.bf16.mxu0 0
    %1424 = vmatpush1.bf16.msra.mxu0 0
    %1425 = vmatprep.subr.bf16.mxu0 0
    %1426 = vmatpush1.bf16.msra.mxu0 0
    %1427 = vmatprep.subr.bf16.mxu0 0
    %1428 = vmatpush1.bf16.msra.mxu0 0
    %1429 = vmatprep.subr.bf16.mxu0 0
    %1430 = vmatpush1.bf16.msra.mxu0 0
    %1431 = vmatprep.mubr.bf16.mxu0 0
    %1432 = vmatmul.mubr.bf16.gmra.mrb[0].mxu0 %v1356
    %v1433 = vpop.f32.mrb[0].mxu0
    %v1434 = vadd.f32 0.0, %v1433
    %v1435 = vpop.f32.mrb[0].mxu0
    %v1436 = vadd.f32 0.0, %v1435
    %v1437 = vpop.f32.mrb[0].mxu0
    %v1438 = vpop.f32.mrb[0].mxu0
    %1439 = vdwg.mxu0
    %v1444 = vrot.slane %v1393, 2
    %v1445 = vrot.slane %v1395, 2
    %v1446 = vrot.slane %v1434, 2
    %v1447 = vrot.slane %v1436, 2
    %v1452 = vadd.f32 %v415, %v1444
    %v1453 = vadd.f32 %v417, %v1445
    %v1454 = vadd.f32 %v458, %v1446
    %v1455 = vadd.f32 %v460, %v1447
    %v1456 = vmul.f32 %v1452, 0.5
    %v1457 = vtanh.pop %v1456
    %v1458 = vmul.f32 %v1457, 0.5
    %v1459 = vadd.f32 %v1458, 0.5
    %v1460 = vmul.f32 %v1453, 0.5
    %v1461 = vtanh.pop %v1460
    %v1462 = vmul.f32 %v1461, 0.5
    %v1463 = vadd.f32 %v1462, 0.5
    %v1464 = vtanh.pop %v1454
    %v1465 = vmul.f32 %v1455, 0.5
    %v1466 = vtanh.pop %v1465
    %v1467 = vmul.f32 %v1466, 0.5
    %v1468 = vadd.f32 %v1467, 0.5
    %v1470 = vrot.slane %v1349, 6
    %v1472 = vmul.f32 %v1463, %v1470
    %v1473 = vmul.f32 %v1459, %v1464
    %v1474 = vadd.f32 %v1472, %v1473
    %v1475 = vtanh.pop %v1474
    %v1476 = vmul.f32 %v1468, %v1475
    %v1478 = vrot.slane %v1476, 6
    %v1480 = vpack.c.bf16 %v321, %v321
    %v1481 = vpack.c.bf16 %v1478, %v1478
    %v1482 = vld [vmem:[#allocation2 + $0x84] sm:$0xf]
    %v1483 = vld [vmem:[#allocation2 + $0x88] sm:$0xf]
    %v1484 = vld [vmem:[#allocation2 + $0x8c] sm:$0xf]
    %v1485 = vld [vmem:[#allocation2 + $0x90] sm:$0xf]
    %v1486 = vld [vmem:[#allocation2 + $0x94] sm:$0xf]
    %v1487 = vld [vmem:[#allocation2 + $0x98] sm:$0xf]
    %v1488 = vld [vmem:[#allocation2 + $0x9c] sm:$0xf]
    %v1489 = vld [vmem:[#allocation2 + $0xa0] sm:$0xf]
    %v1490 = vld [vmem:[#allocation2 + $0xa4] sm:$0xf]
    %v1491 = vld [vmem:[#allocation2 + $0xa8] sm:$0xf]
    %v1492 = vld [vmem:[#allocation2 + $0xac] sm:$0xf]
    %v1493 = vld [vmem:[#allocation2 + $0xb0] sm:$0xf]
    %v1494 = vld [vmem:[#allocation2 + $0xb4] sm:$0xf]
    %v1495 = vld [vmem:[#allocation2 + $0xb8] sm:$0xf]
    %v1496 = vld [vmem:[#allocation2 + $0xbc] sm:$0xf]
    %v1497 = vld [vmem:[#allocation2 + $0xc0] sm:$0xf]
    %v1498 = vld [vmem:[#allocation2 + $0xc4] sm:$0xf]
    %v1499 = vld [vmem:[#allocation2 + $0xc8] sm:$0xf]
    %v1500 = vld [vmem:[#allocation2 + $0xcc] sm:$0xf]
    %v1501 = vld [vmem:[#allocation2 + $0xd0] sm:$0xf]
    %v1502 = vld [vmem:[#allocation2 + $0xd4] sm:$0xf]
    %v1503 = vld [vmem:[#allocation2 + $0xd8] sm:$0xf]
    %v1504 = vld [vmem:[#allocation2 + $0xdc] sm:$0xf]
    %v1505 = vld [vmem:[#allocation2 + $0xe0] sm:$0xf]
    %v1506 = vld [vmem:[#allocation2 + $0xe4] sm:$0xf]
    %v1507 = vld [vmem:[#allocation2 + $0xe8] sm:$0xf]
    %v1508 = vld [vmem:[#allocation2 + $0xec] sm:$0xf]
    %v1509 = vld [vmem:[#allocation2 + $0xf0] sm:$0xf]
    %v1510 = vld [vmem:[#allocation2 + $0xf4] sm:$0xf]
    %v1511 = vld [vmem:[#allocation2 + $0xf8] sm:$0xf]
    %v1512 = vld [vmem:[#allocation2 + $0xfc] sm:$0xf]
    %v1513 = vld [vmem:[#allocation2 + $0x100] sm:$0xf]
    %v1514 = vld [vmem:[%s3 + $0x3] ss:$0 sm:$0xff]
    %v1547 = vunpack.c.l.b16 %v1482
    %v1548 = vunpack.c.l.b16 %v1483
    %v1549 = vunpack.c.l.b16 %v1484
    %v1550 = vunpack.c.l.b16 %v1485
    %v1551 = vunpack.c.l.b16 %v1486
    %v1552 = vunpack.c.l.b16 %v1487
    %v1553 = vunpack.c.l.b16 %v1488
    %v1554 = vunpack.c.l.b16 %v1489
    %v1555 = vunpack.c.l.b16 %v1490
    %v1556 = vunpack.c.l.b16 %v1491
    %v1557 = vunpack.c.l.b16 %v1492
    %v1558 = vunpack.c.l.b16 %v1493
    %v1559 = vunpack.c.l.b16 %v1494
    %v1560 = vunpack.c.l.b16 %v1495
    %v1561 = vunpack.c.l.b16 %v1496
    %v1562 = vunpack.c.l.b16 %v1497
    %v1563 = vunpack.c.l.b16 %v1498
    %v1564 = vunpack.c.l.b16 %v1499
    %v1565 = vunpack.c.l.b16 %v1500
    %v1566 = vunpack.c.l.b16 %v1501
    %v1567 = vunpack.c.l.b16 %v1502
    %v1568 = vunpack.c.l.b16 %v1503
    %v1569 = vunpack.c.l.b16 %v1504
    %v1570 = vunpack.c.l.b16 %v1505
    %v1571 = vunpack.c.l.b16 %v1506
    %v1572 = vunpack.c.l.b16 %v1507
    %v1573 = vunpack.c.l.b16 %v1508
    %v1574 = vunpack.c.l.b16 %v1509
    %v1575 = vunpack.c.l.b16 %v1510
    %v1576 = vunpack.c.l.b16 %v1511
    %v1577 = vunpack.c.l.b16 %v1512
    %v1578 = vunpack.c.l.b16 %v1513
    %v1579 = vpack.c.b16 %v1548, %v1547
    %v1580 = vpack.c.b16 %v1550, %v1549
    %v1581 = vpack.c.b16 %v1552, %v1551
    %v1582 = vpack.c.b16 %v1554, %v1553
    %v1583 = vpack.c.b16 %v1556, %v1555
    %v1584 = vpack.c.b16 %v1558, %v1557
    %v1585 = vpack.c.b16 %v1560, %v1559
    %v1586 = vpack.c.b16 %v1562, %v1561
    %v1587 = vpack.c.b16 %v1564, %v1563
    %v1588 = vpack.c.b16 %v1566, %v1565
    %v1589 = vpack.c.b16 %v1568, %v1567
    %v1590 = vpack.c.b16 %v1570, %v1569
    %v1591 = vpack.c.b16 %v1572, %v1571
    %v1592 = vpack.c.b16 %v1574, %v1573
    %v1593 = vpack.c.b16 %v1576, %v1575
    %v1594 = vpack.c.b16 %v1578, %v1577
    %1611 = vmatprep.subr.bf16.mxu0 0
    %1612 = vmatpush1.bf16.msra.mxu0 %v1579
    %1613 = vmatprep.subr.bf16.mxu0 0
    %1614 = vmatpush1.bf16.msra.mxu0 %v1580
    %1615 = vmatprep.subr.bf16.mxu0 0
    %1616 = vmatpush1.bf16.msra.mxu0 %v1581
    %1617 = vmatprep.subr.bf16.mxu0 0
    %1618 = vmatpush1.bf16.msra.mxu0 %v1582
    %1619 = vmatprep.subr.bf16.mxu0 0
    %1620 = vmatpush1.bf16.msra.mxu0 %v1583
    %1621 = vmatprep.subr.bf16.mxu0 0
    %1622 = vmatpush1.bf16.msra.mxu0 %v1584
    %1623 = vmatprep.subr.bf16.mxu0 0
    %1624 = vmatpush1.bf16.msra.mxu0 %v1585
    %1625 = vmatprep.subr.bf16.mxu0 0
    %1626 = vmatpush1.bf16.msra.mxu0 %v1586
    %1627 = vmatprep.subr.bf16.mxu0 0
    %1628 = vmatpush1.bf16.msra.mxu0 %v1587
    %1629 = vmatprep.subr.bf16.mxu0 0
    %1630 = vmatpush1.bf16.msra.mxu0 %v1588
    %1631 = vmatprep.subr.bf16.mxu0 0
    %1632 = vmatpush1.bf16.msra.mxu0 %v1589
    %1633 = vmatprep.subr.bf16.mxu0 0
    %1634 = vmatpush1.bf16.msra.mxu0 %v1590
    %1635 = vmatprep.subr.bf16.mxu0 0
    %1636 = vmatpush1.bf16.msra.mxu0 %v1591
    %1637 = vmatprep.subr.bf16.mxu0 0
    %1638 = vmatpush1.bf16.msra.mxu0 %v1592
    %1639 = vmatprep.subr.bf16.mxu0 0
    %1640 = vmatpush1.bf16.msra.mxu0 %v1593
    %1641 = vmatprep.subr.bf16.mxu0 0
    %1642 = vmatpush1.bf16.msra.mxu0 %v1594
    %1643 = vmatprep.mubr.bf16.mxu0 %v1481
    %1644 = vmatmul.mubr.bf16.gmra.mrb[0].mxu0 %v1480
    %v1645 = vpop.f32.mrb[0].mxu0
    %v1646 = vadd.f32 %v1514, %v1645
    %v1647 = vpop.f32.mrb[0].mxu0
    %v1648 = vpop.f32.mrb[0].mxu0
    %v1649 = vpop.f32.mrb[0].mxu0
    %1650 = vdwg.mxu0
    %v1651 = vmax.f32 %v1646, 0.0
    %v1652 = vpack.c.bf16 %v1651, %v1651
    %v1653 = vld [vmem:[#allocation2 + $0x104] sm:$0xf]
    %v1654 = vld [vmem:[#allocation2 + $0x108] sm:$0xf]
    %v1655 = vld [vmem:[#allocation2 + $0x10c] sm:$0xf]
    %v1656 = vld [vmem:[#allocation2 + $0x110] sm:$0xf]
    %v1657 = vld [vmem:[#allocation2 + $0x114] sm:$0xf]
    %v1658 = vld [vmem:[#allocation2 + $0x118] sm:$0xf]
    %v1659 = vld [vmem:[#allocation2 + $0x11c] sm:$0xf]
    %v1660 = vld [vmem:[#allocation2 + $0x120] sm:$0xf]
    %v1661 = vld [vmem:[#allocation2 + $0x124] sm:$0xf]
    %v1662 = vld [vmem:[#allocation2 + $0x128] sm:$0xf]
    %v1663 = vld [vmem:[#allocation2 + $0x12c] sm:$0xf]
    %v1664 = vld [vmem:[#allocation2 + $0x130] sm:$0xf]
    %v1665 = vld [vmem:[#allocation2 + $0x134] sm:$0xf]
    %v1666 = vld [vmem:[#allocation2 + $0x138] sm:$0xf]
    %v1667 = vld [vmem:[#allocation2 + $0x13c] sm:$0xf]
    %v1668 = vld [vmem:[#allocation2 + $0x140] sm:$0xf]
    %v1669 = vld [vmem:[%s3 + $0x4] ss:$0 sm:$0xff]
    %v1686 = vunpack.c.l.b16 %v1653
    %v1687 = vunpack.c.l.b16 %v1654
    %v1688 = vunpack.c.l.b16 %v1655
    %v1689 = vunpack.c.l.b16 %v1656
    %v1690 = vunpack.c.l.b16 %v1657
    %v1691 = vunpack.c.l.b16 %v1658
    %v1692 = vunpack.c.l.b16 %v1659
    %v1693 = vunpack.c.l.b16 %v1660
    %v1694 = vunpack.c.l.b16 %v1661
    %v1695 = vunpack.c.l.b16 %v1662
    %v1696 = vunpack.c.l.b16 %v1663
    %v1697 = vunpack.c.l.b16 %v1664
    %v1698 = vunpack.c.l.b16 %v1665
    %v1699 = vunpack.c.l.b16 %v1666
    %v1700 = vunpack.c.l.b16 %v1667
    %v1701 = vunpack.c.l.b16 %v1668
    %v1702 = vpack.c.b16 %v1687, %v1686
    %v1703 = vpack.c.b16 %v1689, %v1688
    %v1704 = vpack.c.b16 %v1691, %v1690
    %v1705 = vpack.c.b16 %v1693, %v1692
    %v1706 = vpack.c.b16 %v1695, %v1694
    %v1707 = vpack.c.b16 %v1697, %v1696
    %v1708 = vpack.c.b16 %v1699, %v1698
    %v1709 = vpack.c.b16 %v1701, %v1700
    %1718 = vmatprep.subr.bf16.mxu0 0
    %1719 = vmatpush1.bf16.msra.mxu0 %v1702
    %1720 = vmatprep.subr.bf16.mxu0 0
    %1721 = vmatpush1.bf16.msra.mxu0 %v1703
    %1722 = vmatprep.subr.bf16.mxu0 0
    %1723 = vmatpush1.bf16.msra.mxu0 %v1704
    %1724 = vmatprep.subr.bf16.mxu0 0
    %1725 = vmatpush1.bf16.msra.mxu0 %v1705
    %1726 = vmatprep.subr.bf16.mxu0 0
    %1727 = vmatpush1.bf16.msra.mxu0 %v1706
    %1728 = vmatprep.subr.bf16.mxu0 0
    %1729 = vmatpush1.bf16.msra.mxu0 %v1707
    %1730 = vmatprep.subr.bf16.mxu0 0
    %1731 = vmatpush1.bf16.msra.mxu0 %v1708
    %1732 = vmatprep.subr.bf16.mxu0 0
    %1733 = vmatpush1.bf16.msra.mxu0 %v1709
    %1734 = vmatprep.subr.bf16.mxu0 0
    %1735 = vmatpush1.bf16.msra.mxu0 0
    %1736 = vmatprep.subr.bf16.mxu0 0
    %1737 = vmatpush1.bf16.msra.mxu0 0
    %1738 = vmatprep.subr.bf16.mxu0 0
    %1739 = vmatpush1.bf16.msra.mxu0 0
    %1740 = vmatprep.subr.bf16.mxu0 0
    %1741 = vmatpush1.bf16.msra.mxu0 0
    %1742 = vmatprep.subr.bf16.mxu0 0
    %1743 = vmatpush1.bf16.msra.mxu0 0
    %1744 = vmatprep.subr.bf16.mxu0 0
    %1745 = vmatpush1.bf16.msra.mxu0 0
    %1746 = vmatprep.subr.bf16.mxu0 0
    %1747 = vmatpush1.bf16.msra.mxu0 0
    %1748 = vmatprep.subr.bf16.mxu0 0
    %1749 = vmatpush1.bf16.msra.mxu0 0
    %1750 = vmatprep.mubr.bf16.mxu0 0
    %1751 = vmatmul.mubr.bf16.gmra.mrb[0].mxu0 %v1652
    %v1752 = vpop.f32.mrb[0].mxu0
    %v1753 = vadd.f32 %v1669, %v1752
    %v1754 = vpop.f32.mrb[0].mxu0
    %v1755 = vpop.f32.mrb[0].mxu0
    %v1756 = vpop.f32.mrb[0].mxu0
    %1757 = vdwg.mxu0
    %v1758 = vmax.f32 %v1753, 0.0
    %v1759 = vpack.c.bf16 %v1758, %v1758
    %v1760 = vld [vmem:[#allocation2 + $0x144] sm:$0xf]
    %v1761 = vld [vmem:[#allocation2 + $0x148] sm:$0xf]
    %v1762 = vld [vmem:[#allocation2 + $0x14c] sm:$0xf]
    %v1763 = vld [vmem:[#allocation2 + $0x150] sm:$0xf]
    %v1764 = vld [vmem:[#allocation2 + $0x154] sm:$0xf]
    %v1765 = vld [vmem:[#allocation2 + $0x158] sm:$0xf]
    %v1766 = vld [vmem:[#allocation2 + $0x15c] sm:$0xf]
    %v1767 = vld [vmem:[#allocation2 + $0x160] sm:$0xf]
    %v1768 = vld [vmem:[#allocation2 + $0x164] sm:$0xf]
    %v1769 = vld [vmem:[#allocation2 + $0x168] sm:$0xf]
    %v1770 = vld [vmem:[#allocation2 + $0x16c] sm:$0xf]
    %v1771 = vld [vmem:[#allocation2 + $0x170] sm:$0xf]
    %v1772 = vld [vmem:[#allocation2 + $0x174] sm:$0xf]
    %v1773 = vld [vmem:[#allocation2 + $0x178] sm:$0xf]
    %v1774 = vld [vmem:[#allocation2 + $0x17c] sm:$0xf]
    %v1775 = vld [vmem:[#allocation2 + $0x180] sm:$0xf]
    %v1776 = vld [vmem:[%s3 + $0x5] ss:$0 sm:$0xff]
    %v1793 = vunpack.c.l.b16 %v1760
    %v1794 = vunpack.c.l.b16 %v1761
    %v1795 = vunpack.c.l.b16 %v1762
    %v1796 = vunpack.c.l.b16 %v1763
    %v1797 = vunpack.c.l.b16 %v1764
    %v1798 = vunpack.c.l.b16 %v1765
    %v1799 = vunpack.c.l.b16 %v1766
    %v1800 = vunpack.c.l.b16 %v1767
    %v1801 = vunpack.c.l.b16 %v1768
    %v1802 = vunpack.c.l.b16 %v1769
    %v1803 = vunpack.c.l.b16 %v1770
    %v1804 = vunpack.c.l.b16 %v1771
    %v1805 = vunpack.c.l.b16 %v1772
    %v1806 = vunpack.c.l.b16 %v1773
    %v1807 = vunpack.c.l.b16 %v1774
    %v1808 = vunpack.c.l.b16 %v1775
    %v1809 = vpack.c.b16 %v1794, %v1793
    %v1810 = vpack.c.b16 %v1796, %v1795
    %v1811 = vpack.c.b16 %v1798, %v1797
    %v1812 = vpack.c.b16 %v1800, %v1799
    %v1813 = vpack.c.b16 %v1802, %v1801
    %v1814 = vpack.c.b16 %v1804, %v1803
    %v1815 = vpack.c.b16 %v1806, %v1805
    %v1816 = vpack.c.b16 %v1808, %v1807
    %1825 = vmatprep.subr.bf16.mxu0 0
    %1826 = vmatpush1.bf16.msra.mxu0 %v1809
    %1827 = vmatprep.subr.bf16.mxu0 0
    %1828 = vmatpush1.bf16.msra.mxu0 %v1810
    %1829 = vmatprep.subr.bf16.mxu0 0
    %1830 = vmatpush1.bf16.msra.mxu0 %v1811
    %1831 = vmatprep.subr.bf16.mxu0 0
    %1832 = vmatpush1.bf16.msra.mxu0 %v1812
    %1833 = vmatprep.subr.bf16.mxu0 0
    %1834 = vmatpush1.bf16.msra.mxu0 %v1813
    %1835 = vmatprep.subr.bf16.mxu0 0
    %1836 = vmatpush1.bf16.msra.mxu0 %v1814
    %1837 = vmatprep.subr.bf16.mxu0 0
    %1838 = vmatpush1.bf16.msra.mxu0 %v1815
    %1839 = vmatprep.subr.bf16.mxu0 0
    %1840 = vmatpush1.bf16.msra.mxu0 %v1816
    %1841 = vmatprep.subr.bf16.mxu0 0
    %1842 = vmatpush1.bf16.msra.mxu0 0
    %1843 = vmatprep.subr.bf16.mxu0 0
    %1844 = vmatpush1.bf16.msra.mxu0 0
    %1845 = vmatprep.subr.bf16.mxu0 0
    %1846 = vmatpush1.bf16.msra.mxu0 0
    %1847 = vmatprep.subr.bf16.mxu0 0
    %1848 = vmatpush1.bf16.msra.mxu0 0
    %1849 = vmatprep.subr.bf16.mxu0 0
    %1850 = vmatpush1.bf16.msra.mxu0 0
    %1851 = vmatprep.subr.bf16.mxu0 0
    %1852 = vmatpush1.bf16.msra.mxu0 0
    %1853 = vmatprep.subr.bf16.mxu0 0
    %1854 = vmatpush1.bf16.msra.mxu0 0
    %1855 = vmatprep.subr.bf16.mxu0 0
    %1856 = vmatpush1.bf16.msra.mxu0 0
    %1857 = vmatprep.mubr.bf16.mxu0 0
    %1858 = vmatmul.mubr.bf16.gmra.mrb[0].mxu0 %v1759
    %v1859 = vpop.f32.mrb[0].mxu0
    %v1860 = vadd.f32 %v1776, %v1859
    %v1861 = vpop.f32.mrb[0].mxu0
    %v1862 = vpop.f32.mrb[0].mxu0
    %v1863 = vpop.f32.mrb[0].mxu0
    %1864 = vdwg.mxu0
    %v1865 = vtanh.pop %v1860
    %1866 = vst [vmem:[#allocation5] sm:$0x3] %v1865
    // Predicated region
    $region22: #{touch_emotion_mapper.1} parent=1 // pred_check
      _
    $region23: #{touch_emotion_mapper.1} parent=1 // pred_check_branch
      %1868 = sbr.rel (0) target = $region25
    $region24: #{touch_emotion_mapper.1} parent=1 // pred_region
      %s1870 = ssub.s32 32, 32
      %1871 = vsyncadd [#allocation4], %s1870
      %s1873 = sshll.u32 [#allocation5], 4
      %s1874 = int_to_ptr.vmem [resolvable:$true] %s1873
      %1876 = dma.vmem_to_hbm [thread:$0]  %s1874, 32, %s4, [#allocation4]
    $region25: #{touch_emotion_mapper.1} parent=1 // pred_fallthru
      _
    // Predicated region
    $region26: #{touch_emotion_mapper.1} parent=1 // pred_check
      _
    $region27: #{touch_emotion_mapper.1} parent=1 // pred_check_branch
      %1878 = sbr.rel (0) target = $region29
    $region28: #{touch_emotion_mapper.1} parent=1 // pred_region
      %1879 = dma.done [#allocation4], 32
    $region29: #{touch_emotion_mapper.1} parent=1 // pred_fallthru
      _
    %1880 = vsyncpa [#allocation3], 1
    %1881 = vsyncpa [#allocation4], 1

</llo_original>
